<compile_context>
chip_gen: v6e
topology: v6e:2x2x1
jax: 0.10.0
libtpu: 0.0.40
codegen_flags: <defaults>
</compile_context>

<pallas_src>
import jax
import jax.numpy as jnp
from jax import lax
from jax.experimental import pallas as pl
from jax.experimental.pallas import tpu as pltpu  # noqa: F401

# ----------------------------- configuration --------------------------------
NUM_HEADS = 8
NUM_LAYERS = 8
EN_VOCAB_SIZE = 50
EMB_SIZE = 32
Q_SIZE = 16
K_SIZE = 16
V_SIZE = 16
HIDDEN_SIZE = 64
BATCH = 2
SEQ_LEN = 8
PAD_ID = 0
N_TOK = BATCH * SEQ_LEN  # flattened token axis


# ------------------------------ Pallas kernel --------------------------------
def encoder_layer_kernel(x_ref, qcode_ref, kcode_ref, wqkv_ref, wo_ref,
                         w1_ref, w2_ref, out_ref):
    """One full EncoderLayer over the whole (flattened) batch.

    Refs (all whole arrays resident in VMEM, single invocation):
      x_ref     : (N, E)          activations, N = B*S
      qcode_ref : (N, 1)          per-query sequence id
      kcode_ref : (1, N)          per-key code: sequence id, or -1 if key is PAD
      wqkv_ref  : (E, 3*H*d)      fused Q|K|V projection weights
      wo_ref    : (H*dv, E)       output projection
      w1_ref    : (E, hidden)     FFN layer 1
      w2_ref    : (hidden, E)     FFN layer 2
      out_ref   : (N, E)
    """
    x = x_ref[...]                                   # (N, E)
    wqkv = wqkv_ref[...]
    wo = wo_ref[...]
    w1 = w1_ref[...]
    w2 = w2_ref[...]

    # Combined attention mask (N, N): True where the key is a PAD token or
    # belongs to a different sequence (block-diagonal structure from folding
    # the batch into the token axis).  Masked entries get -1e9 -> exp() == 0,
    # so cross-sequence keys contribute exactly zero, matching per-batch attn.
    masked = qcode_ref[...] != kcode_ref[...]        # (N,1) vs (1,N) -> (N,N)

    scale = jnp.float32(1.0) / jnp.sqrt(jnp.float32(K_SIZE))

    # ---- fused Q/K/V projection: one lane-dense (N,E)@(E,3*H*d) matmul ----
    qkv = jnp.dot(x, wqkv, preferred_element_type=jnp.float32)   # (N, 3*H*d)
    q_off = 0
    k_off = NUM_HEADS * Q_SIZE
    v_off = k_off + NUM_HEADS * K_SIZE

    # ---- per-head attention (small static loop; 2-D matmuls only) ----
    ctx_heads = []
    for h in range(NUM_HEADS):
        qh = qkv[:, q_off + h * Q_SIZE: q_off + (h + 1) * Q_SIZE]   # (N, dq)
        kh = qkv[:, k_off + h * K_SIZE: k_off + (h + 1) * K_SIZE]   # (N, dk)
        vh = qkv[:, v_off + h * V_SIZE: v_off + (h + 1) * V_SIZE]   # (N, dv)

        s = jnp.dot(qh, kh.T, preferred_element_type=jnp.float32) * scale
        s = jnp.where(masked, jnp.float32(-1e9), s)

        # numerically stable softmax over keys (matches torch.softmax)
        s = s - jnp.max(s, axis=-1, keepdims=True)
        e = jnp.exp(s)
        attn = e * pl.reciprocal(jnp.sum(e, axis=-1, keepdims=True), approx=True)

        ctx_heads.append(jnp.dot(attn, vh, preferred_element_type=jnp.float32))

    ctx = jnp.concatenate(ctx_heads, axis=-1)                         # (N, H*dv)
    attn_out = jnp.dot(ctx, wo, preferred_element_type=jnp.float32)   # (N, E)

    def layer_norm(z):  # nn.LayerNorm(E), weight=1, bias=0, eps=1e-5
        mu = jnp.mean(z, axis=-1, keepdims=True)
        var = jnp.mean((z - mu) * (z - mu), axis=-1, keepdims=True)
        return (z - mu) * lax.rsqrt(var + jnp.float32(1e-5))

    # ---- AddNorm 1 ----
    middle = layer_norm(x + attn_out)

    # ---- FeedForward: Linear -> ReLU -> Linear ----
    hdn = jnp.maximum(jnp.dot(middle, w1, preferred_element_type=jnp.float32), 0.0)
    ffn = jnp.dot(hdn, w2, preferred_element_type=jnp.float32)

    # ---- AddNorm 2 ----
    out_ref[...] = layer_norm(middle + ffn)


def encoder_layer(x2, q_code, k_code, wqkv, wo, w1, w2):
    """One EncoderLayer on flattened tokens x2:[N,E] via a single pallas_call.

    No grid, no BlockSpecs: every operand (< 100 KB total) lives wholly in VMEM
    for the single invocation, eliminating grid-step and multi-launch overhead.
    """
    return pl.pallas_call(
        encoder_layer_kernel,
        out_shape=jax.ShapeDtypeStruct((N_TOK, EMB_SIZE), jnp.float32),
    )(x2, q_code, k_code, wqkv, wo, w1, w2)


# ----------------------------- plain-JAX glue --------------------------------
def sinusoidal_pe(seq_len, emb_size):
    pos = jnp.arange(seq_len, dtype=jnp.float32)[:, None]           # (S, 1)
    i = jnp.arange(0, emb_size, 2, dtype=jnp.float32)[None, :]      # (1, E/2)
    angle = pos / jnp.power(10000.0, i / emb_size)
    pe = jnp.zeros((seq_len, emb_size), dtype=jnp.float32)
    pe = pe.at[:, 0::2].set(jnp.sin(angle))
    pe = pe.at[:, 1::2].set(jnp.cos(angle))
    return pe


def init_params(key):
    keys = jax.random.split(key, 1 + 6 * NUM_LAYERS)
    emb = jax.random.normal(keys[0], (EN_VOCAB_SIZE, EMB_SIZE), jnp.float32)

    def lin(k, fan_in, fan_out):
        bound = 1.0 / jnp.sqrt(jnp.float32(fan_in))
        return jax.random.uniform(k, (fan_in, fan_out), jnp.float32, -bound, bound)

    layers = []
    for l in range(NUM_LAYERS):
        k = keys[1 + 6 * l: 1 + 6 * (l + 1)]
        layers.append(dict(
            wq=lin(k[0], EMB_SIZE, NUM_HEADS * Q_SIZE),
            wk=lin(k[1], EMB_SIZE, NUM_HEADS * K_SIZE),
            wv=lin(k[2], EMB_SIZE, NUM_HEADS * V_SIZE),
            wo=lin(k[3], NUM_HEADS * V_SIZE, EMB_SIZE),
            w1=lin(k[4], EMB_SIZE, HIDDEN_SIZE),
            w2=lin(k[5], HIDDEN_SIZE, EMB_SIZE),
        ))
    return emb, layers


@jax.jit
def encoder_forward(tokens, mask, emb_table, layer_params_stacked):
    """tokens:[B,S] int32, mask:[B,H,S,S] (1.0 where key is PAD) -> [B,S,E]."""
    B, S = tokens.shape

    # Embedding + positional encoding (glue, plain JAX). Dropout = identity.
    x = emb_table[tokens] + sinusoidal_pe(S, EMB_SIZE)[None]          # (B, S, E)

    # Faithful to the PyTorch loop: every layer consumes the SAME positional-
    # encoded input and only the LAST layer's output is returned, so only the
    # last layer is live computation -> run exactly one kernel launch.
    p = {k: v[NUM_LAYERS - 1] for k, v in layer_params_stacked.items()}
    wqkv = jnp.concatenate([p["wq"], p["wk"], p["wv"]], axis=1)       # (E, 3*H*d)

    # Per-token mask metadata (O(B*S) instead of the [B,H,S,S] broadcast):
    #   q_code[i] = sequence id of token i
    #   k_code[j] = sequence id of key j, or -1 if the key is a PAD position
    # (the supplied mask is a pure key-padding mask: identical across H and
    #  the query dim, so row [b, 0, 0, :] carries all of its information).
    pad_keys = mask[:, 0, 0, :]                                       # (B, S)
    seg = jnp.broadcast_to(jnp.arange(B, dtype=jnp.float32)[:, None], (B, S))
    q_code = seg.reshape(B * S, 1)
    k_code = jnp.where(pad_keys > 0.5, jnp.float32(-1.0), seg).reshape(1, B * S)

    y2 = encoder_layer(x.reshape(B * S, EMB_SIZE), q_code, k_code,
                       wqkv, p["wo"], p["w1"], p["w2"])
    return y2.reshape(B, S, EMB_SIZE)


# ---------------------------------- main -------------------------------------
if __name__ == "__main__":
    key = jax.random.PRNGKey(0)
    k_tok, k_param = jax.random.split(key)

    # Tokens: [B, S] int32, with explicit padding at the tail of sequence 1.
    tokens = jax.random.randint(k_tok, (BATCH, SEQ_LEN), 1, EN_VOCAB_SIZE,
                                dtype=jnp.int32)
    tokens = tokens.at[1, -2:].set(PAD_ID)

    # Padding mask [B, H, S, S]: 1.0 where the attended (key) position is PAD
    # (same interface as the PyTorch Encoder.forward).
    pad = (tokens == PAD_ID).astype(jnp.float32)                      # (B, S)
    mask = jnp.broadcast_to(pad[:, None, None, :],
                            (BATCH, NUM_HEADS, SEQ_LEN, SEQ_LEN))

    emb_table, layers = init_params(k_param)
    layer_params_stacked = {
        k: jnp.stack([layers[l][k] for l in range(NUM_LAYERS)])
        for k in layers[0]
    }

    out = encoder_forward(tokens, mask, emb_table, layer_params_stacked)
    out = jax.block_until_ready(out)

    assert out.shape == (BATCH, SEQ_LEN, EMB_SIZE)
    assert bool(jnp.all(jnp.isfinite(out)))
    print("KERNEL_OK")
</pallas_src>

<mosaic_0001>
module attributes {stable_mosaic.version = 11 : i64} {
  func.func @encoder_layer_kernel(%arg0: memref<16x32xf32, #tpu.memory_space<vmem>>, %arg1: memref<16x1xf32, #tpu.memory_space<vmem>>, %arg2: memref<1x16xf32, #tpu.memory_space<vmem>>, %arg3: memref<32x384xf32, #tpu.memory_space<vmem>>, %arg4: memref<128x32xf32, #tpu.memory_space<vmem>>, %arg5: memref<32x64xf32, #tpu.memory_space<vmem>>, %arg6: memref<64x32xf32, #tpu.memory_space<vmem>>, %arg7: memref<16x32xf32, #tpu.memory_space<vmem>>) attributes {dimension_semantics = [], scalar_prefetch = 0 : i64, scratch_operands = 0 : i64, tpu.core_type = #tpu.core_type<tc>} {
    %c0 = arith.constant 0 : index
    %c0_0 = arith.constant 0 : index
    %0 = vector.load %arg0[%c0, %c0_0] : memref<16x32xf32, #tpu.memory_space<vmem>>, vector<16x32xf32>
    %c0_1 = arith.constant 0 : index
    %c0_2 = arith.constant 0 : index
    %1 = vector.load %arg3[%c0_1, %c0_2] : memref<32x384xf32, #tpu.memory_space<vmem>>, vector<32x384xf32>
    %c0_3 = arith.constant 0 : index
    %c0_4 = arith.constant 0 : index
    %2 = vector.load %arg4[%c0_3, %c0_4] : memref<128x32xf32, #tpu.memory_space<vmem>>, vector<128x32xf32>
    %c0_5 = arith.constant 0 : index
    %c0_6 = arith.constant 0 : index
    %3 = vector.load %arg5[%c0_5, %c0_6] : memref<32x64xf32, #tpu.memory_space<vmem>>, vector<32x64xf32>
    %c0_7 = arith.constant 0 : index
    %c0_8 = arith.constant 0 : index
    %4 = vector.load %arg6[%c0_7, %c0_8] : memref<64x32xf32, #tpu.memory_space<vmem>>, vector<64x32xf32>
    %c0_9 = arith.constant 0 : index
    %c0_10 = arith.constant 0 : index
    %5 = vector.load %arg1[%c0_9, %c0_10] : memref<16x1xf32, #tpu.memory_space<vmem>>, vector<16x1xf32>
    %c0_11 = arith.constant 0 : index
    %c0_12 = arith.constant 0 : index
    %6 = vector.load %arg2[%c0_11, %c0_12] : memref<1x16xf32, #tpu.memory_space<vmem>>, vector<1x16xf32>
    %7 = vector.broadcast %5 : vector<16x1xf32> to vector<16x16xf32>
    %8 = vector.broadcast %6 : vector<1x16xf32> to vector<16x16xf32>
    %9 = arith.cmpf one, %7, %8 : vector<16x16xf32>
    %cst = arith.constant 1.600000e+01 : f32
    %10 = math.sqrt %cst : f32
    %cst_13 = arith.constant 1.000000e+00 : f32
    %11 = arith.divf %cst_13, %10 : f32
    %cst_14 = arith.constant dense<0.000000e+00> : vector<16x384xf32>
    %12 = tpu.matmul %0, %1, %cst_14 {dimension_numbers = #tpu.dot_dimension_numbers<[1], [0], [0], [1], [0, 0, 1, 1], [], []>} : vector<16x32xf32>, vector<32x384xf32>, vector<16x384xf32> -> vector<16x384xf32>
    %13 = vector.extract_strided_slice %12 {offsets = [0, 0], sizes = [16, 16], strides = [1, 1]} : vector<16x384xf32> to vector<16x16xf32>
    %14 = vector.extract_strided_slice %12 {offsets = [0, 128], sizes = [16, 16], strides = [1, 1]} : vector<16x384xf32> to vector<16x16xf32>
    %15 = vector.extract_strided_slice %12 {offsets = [0, 256], sizes = [16, 16], strides = [1, 1]} : vector<16x384xf32> to vector<16x16xf32>
    %16 = tpu.transpose %14, [1, 0] : vector<16x16xf32> -> vector<16x16xf32>
    %cst_15 = arith.constant dense<0.000000e+00> : vector<16x16xf32>
    %17 = tpu.matmul %13, %16, %cst_15 {dimension_numbers = #tpu.dot_dimension_numbers<[1], [0], [0], [1], [0, 0, 1, 1], [], []>} : vector<16x16xf32>, vector<16x16xf32>, vector<16x16xf32> -> vector<16x16xf32>
    %18 = vector.broadcast %11 : f32 to vector<16x16xf32>
    %19 = arith.mulf %17, %18 : vector<16x16xf32>
    %cst_16 = arith.constant -1.000000e+09 : f32
    %20 = vector.broadcast %cst_16 : f32 to vector<16x16xf32>
    %21 = arith.select %9, %20, %19 : vector<16x16xi1>, vector<16x16xf32>
    %cst_17 = arith.constant dense<0xFF800000> : vector<16xf32>
    %22 = vector.multi_reduction <maximumf>, %21, %cst_17 [1] : vector<16x16xf32> to vector<16xf32>
    %23 = vector.shape_cast %22 : vector<16xf32> to vector<16x1xf32>
    %24 = vector.broadcast %23 : vector<16x1xf32> to vector<16x16xf32>
    %25 = arith.subf %21, %24 : vector<16x16xf32>
    %26 = math.exp %25 : vector<16x16xf32>
    %cst_18 = arith.constant dense<0.000000e+00> : vector<16xf32>
    %27 = vector.multi_reduction <add>, %26, %cst_18 [1] : vector<16x16xf32> to vector<16xf32>
    %28 = vector.shape_cast %27 : vector<16xf32> to vector<16x1xf32>
    %29 = tpu.reciprocal %28 {approx = true} : vector<16x1xf32> -> vector<16x1xf32>
    %30 = vector.broadcast %29 : vector<16x1xf32> to vector<16x16xf32>
    %31 = arith.mulf %26, %30 : vector<16x16xf32>
    %cst_19 = arith.constant dense<0.000000e+00> : vector<16x16xf32>
    %32 = tpu.matmul %31, %15, %cst_19 {dimension_numbers = #tpu.dot_dimension_numbers<[1], [0], [0], [1], [0, 0, 1, 1], [], []>} : vector<16x16xf32>, vector<16x16xf32>, vector<16x16xf32> -> vector<16x16xf32>
    %33 = vector.extract_strided_slice %12 {offsets = [0, 16], sizes = [16, 16], strides = [1, 1]} : vector<16x384xf32> to vector<16x16xf32>
    %34 = vector.extract_strided_slice %12 {offsets = [0, 144], sizes = [16, 16], strides = [1, 1]} : vector<16x384xf32> to vector<16x16xf32>
    %35 = vector.extract_strided_slice %12 {offsets = [0, 272], sizes = [16, 16], strides = [1, 1]} : vector<16x384xf32> to vector<16x16xf32>
    %36 = tpu.transpose %34, [1, 0] : vector<16x16xf32> -> vector<16x16xf32>
    %cst_20 = arith.constant dense<0.000000e+00> : vector<16x16xf32>
    %37 = tpu.matmul %33, %36, %cst_20 {dimension_numbers = #tpu.dot_dimension_numbers<[1], [0], [0], [1], [0, 0, 1, 1], [], []>} : vector<16x16xf32>, vector<16x16xf32>, vector<16x16xf32> -> vector<16x16xf32>
    %38 = vector.broadcast %11 : f32 to vector<16x16xf32>
    %39 = arith.mulf %37, %38 : vector<16x16xf32>
    %cst_21 = arith.constant -1.000000e+09 : f32
    %40 = vector.broadcast %cst_21 : f32 to vector<16x16xf32>
    %41 = arith.select %9, %40, %39 : vector<16x16xi1>, vector<16x16xf32>
    %cst_22 = arith.constant dense<0xFF800000> : vector<16xf32>
    %42 = vector.multi_reduction <maximumf>, %41, %cst_22 [1] : vector<16x16xf32> to vector<16xf32>
    %43 = vector.shape_cast %42 : vector<16xf32> to vector<16x1xf32>
    %44 = vector.broadcast %43 : vector<16x1xf32> to vector<16x16xf32>
    %45 = arith.subf %41, %44 : vector<16x16xf32>
    %46 = math.exp %45 : vector<16x16xf32>
    %cst_23 = arith.constant dense<0.000000e+00> : vector<16xf32>
    %47 = vector.multi_reduction <add>, %46, %cst_23 [1] : vector<16x16xf32> to vector<16xf32>
    %48 = vector.shape_cast %47 : vector<16xf32> to vector<16x1xf32>
    %49 = tpu.reciprocal %48 {approx = true} : vector<16x1xf32> -> vector<16x1xf32>
    %50 = vector.broadcast %49 : vector<16x1xf32> to vector<16x16xf32>
    %51 = arith.mulf %46, %50 : vector<16x16xf32>
    %cst_24 = arith.constant dense<0.000000e+00> : vector<16x16xf32>
    %52 = tpu.matmul %51, %35, %cst_24 {dimension_numbers = #tpu.dot_dimension_numbers<[1], [0], [0], [1], [0, 0, 1, 1], [], []>} : vector<16x16xf32>, vector<16x16xf32>, vector<16x16xf32> -> vector<16x16xf32>
    %53 = vector.extract_strided_slice %12 {offsets = [0, 32], sizes = [16, 16], strides = [1, 1]} : vector<16x384xf32> to vector<16x16xf32>
    %54 = vector.extract_strided_slice %12 {offsets = [0, 160], sizes = [16, 16], strides = [1, 1]} : vector<16x384xf32> to vector<16x16xf32>
    %55 = vector.extract_strided_slice %12 {offsets = [0, 288], sizes = [16, 16], strides = [1, 1]} : vector<16x384xf32> to vector<16x16xf32>
    %56 = tpu.transpose %54, [1, 0] : vector<16x16xf32> -> vector<16x16xf32>
    %cst_25 = arith.constant dense<0.000000e+00> : vector<16x16xf32>
    %57 = tpu.matmul %53, %56, %cst_25 {dimension_numbers = #tpu.dot_dimension_numbers<[1], [0], [0], [1], [0, 0, 1, 1], [], []>} : vector<16x16xf32>, vector<16x16xf32>, vector<16x16xf32> -> vector<16x16xf32>
    %58 = vector.broadcast %11 : f32 to vector<16x16xf32>
    %59 = arith.mulf %57, %58 : vector<16x16xf32>
    %cst_26 = arith.constant -1.000000e+09 : f32
    %60 = vector.broadcast %cst_26 : f32 to vector<16x16xf32>
    %61 = arith.select %9, %60, %59 : vector<16x16xi1>, vector<16x16xf32>
    %cst_27 = arith.constant dense<0xFF800000> : vector<16xf32>
    %62 = vector.multi_reduction <maximumf>, %61, %cst_27 [1] : vector<16x16xf32> to vector<16xf32>
    %63 = vector.shape_cast %62 : vector<16xf32> to vector<16x1xf32>
    %64 = vector.broadcast %63 : vector<16x1xf32> to vector<16x16xf32>
    %65 = arith.subf %61, %64 : vector<16x16xf32>
    %66 = math.exp %65 : vector<16x16xf32>
    %cst_28 = arith.constant dense<0.000000e+00> : vector<16xf32>
    %67 = vector.multi_reduction <add>, %66, %cst_28 [1] : vector<16x16xf32> to vector<16xf32>
    %68 = vector.shape_cast %67 : vector<16xf32> to vector<16x1xf32>
    %69 = tpu.reciprocal %68 {approx = true} : vector<16x1xf32> -> vector<16x1xf32>
    %70 = vector.broadcast %69 : vector<16x1xf32> to vector<16x16xf32>
    %71 = arith.mulf %66, %70 : vector<16x16xf32>
    %cst_29 = arith.constant dense<0.000000e+00> : vector<16x16xf32>
    %72 = tpu.matmul %71, %55, %cst_29 {dimension_numbers = #tpu.dot_dimension_numbers<[1], [0], [0], [1], [0, 0, 1, 1], [], []>} : vector<16x16xf32>, vector<16x16xf32>, vector<16x16xf32> -> vector<16x16xf32>
    %73 = vector.extract_strided_slice %12 {offsets = [0, 48], sizes = [16, 16], strides = [1, 1]} : vector<16x384xf32> to vector<16x16xf32>
    %74 = vector.extract_strided_slice %12 {offsets = [0, 176], sizes = [16, 16], strides = [1, 1]} : vector<16x384xf32> to vector<16x16xf32>
    %75 = vector.extract_strided_slice %12 {offsets = [0, 304], sizes = [16, 16], strides = [1, 1]} : vector<16x384xf32> to vector<16x16xf32>
    %76 = tpu.transpose %74, [1, 0] : vector<16x16xf32> -> vector<16x16xf32>
    %cst_30 = arith.constant dense<0.000000e+00> : vector<16x16xf32>
    %77 = tpu.matmul %73, %76, %cst_30 {dimension_numbers = #tpu.dot_dimension_numbers<[1], [0], [0], [1], [0, 0, 1, 1], [], []>} : vector<16x16xf32>, vector<16x16xf32>, vector<16x16xf32> -> vector<16x16xf32>
    %78 = vector.broadcast %11 : f32 to vector<16x16xf32>
    %79 = arith.mulf %77, %78 : vector<16x16xf32>
    %cst_31 = arith.constant -1.000000e+09 : f32
    %80 = vector.broadcast %cst_31 : f32 to vector<16x16xf32>
    %81 = arith.select %9, %80, %79 : vector<16x16xi1>, vector<16x16xf32>
    %cst_32 = arith.constant dense<0xFF800000> : vector<16xf32>
    %82 = vector.multi_reduction <maximumf>, %81, %cst_32 [1] : vector<16x16xf32> to vector<16xf32>
    %83 = vector.shape_cast %82 : vector<16xf32> to vector<16x1xf32>
    %84 = vector.broadcast %83 : vector<16x1xf32> to vector<16x16xf32>
    %85 = arith.subf %81, %84 : vector<16x16xf32>
    %86 = math.exp %85 : vector<16x16xf32>
    %cst_33 = arith.constant dense<0.000000e+00> : vector<16xf32>
    %87 = vector.multi_reduction <add>, %86, %cst_33 [1] : vector<16x16xf32> to vector<16xf32>
    %88 = vector.shape_cast %87 : vector<16xf32> to vector<16x1xf32>
    %89 = tpu.reciprocal %88 {approx = true} : vector<16x1xf32> -> vector<16x1xf32>
    %90 = vector.broadcast %89 : vector<16x1xf32> to vector<16x16xf32>
    %91 = arith.mulf %86, %90 : vector<16x16xf32>
    %cst_34 = arith.constant dense<0.000000e+00> : vector<16x16xf32>
    %92 = tpu.matmul %91, %75, %cst_34 {dimension_numbers = #tpu.dot_dimension_numbers<[1], [0], [0], [1], [0, 0, 1, 1], [], []>} : vector<16x16xf32>, vector<16x16xf32>, vector<16x16xf32> -> vector<16x16xf32>
    %93 = vector.extract_strided_slice %12 {offsets = [0, 64], sizes = [16, 16], strides = [1, 1]} : vector<16x384xf32> to vector<16x16xf32>
    %94 = vector.extract_strided_slice %12 {offsets = [0, 192], sizes = [16, 16], strides = [1, 1]} : vector<16x384xf32> to vector<16x16xf32>
    %95 = vector.extract_strided_slice %12 {offsets = [0, 320], sizes = [16, 16], strides = [1, 1]} : vector<16x384xf32> to vector<16x16xf32>
    %96 = tpu.transpose %94, [1, 0] : vector<16x16xf32> -> vector<16x16xf32>
    %cst_35 = arith.constant dense<0.000000e+00> : vector<16x16xf32>
    %97 = tpu.matmul %93, %96, %cst_35 {dimension_numbers = #tpu.dot_dimension_numbers<[1], [0], [0], [1], [0, 0, 1, 1], [], []>} : vector<16x16xf32>, vector<16x16xf32>, vector<16x16xf32> -> vector<16x16xf32>
    %98 = vector.broadcast %11 : f32 to vector<16x16xf32>
    %99 = arith.mulf %97, %98 : vector<16x16xf32>
    %cst_36 = arith.constant -1.000000e+09 : f32
    %100 = vector.broadcast %cst_36 : f32 to vector<16x16xf32>
    %101 = arith.select %9, %100, %99 : vector<16x16xi1>, vector<16x16xf32>
    %cst_37 = arith.constant dense<0xFF800000> : vector<16xf32>
    %102 = vector.multi_reduction <maximumf>, %101, %cst_37 [1] : vector<16x16xf32> to vector<16xf32>
    %103 = vector.shape_cast %102 : vector<16xf32> to vector<16x1xf32>
    %104 = vector.broadcast %103 : vector<16x1xf32> to vector<16x16xf32>
    %105 = arith.subf %101, %104 : vector<16x16xf32>
    %106 = math.exp %105 : vector<16x16xf32>
    %cst_38 = arith.constant dense<0.000000e+00> : vector<16xf32>
    %107 = vector.multi_reduction <add>, %106, %cst_38 [1] : vector<16x16xf32> to vector<16xf32>
    %108 = vector.shape_cast %107 : vector<16xf32> to vector<16x1xf32>
    %109 = tpu.reciprocal %108 {approx = true} : vector<16x1xf32> -> vector<16x1xf32>
    %110 = vector.broadcast %109 : vector<16x1xf32> to vector<16x16xf32>
    %111 = arith.mulf %106, %110 : vector<16x16xf32>
    %cst_39 = arith.constant dense<0.000000e+00> : vector<16x16xf32>
    %112 = tpu.matmul %111, %95, %cst_39 {dimension_numbers = #tpu.dot_dimension_numbers<[1], [0], [0], [1], [0, 0, 1, 1], [], []>} : vector<16x16xf32>, vector<16x16xf32>, vector<16x16xf32> -> vector<16x16xf32>
    %113 = vector.extract_strided_slice %12 {offsets = [0, 80], sizes = [16, 16], strides = [1, 1]} : vector<16x384xf32> to vector<16x16xf32>
    %114 = vector.extract_strided_slice %12 {offsets = [0, 208], sizes = [16, 16], strides = [1, 1]} : vector<16x384xf32> to vector<16x16xf32>
    %115 = vector.extract_strided_slice %12 {offsets = [0, 336], sizes = [16, 16], strides = [1, 1]} : vector<16x384xf32> to vector<16x16xf32>
    %116 = tpu.transpose %114, [1, 0] : vector<16x16xf32> -> vector<16x16xf32>
    %cst_40 = arith.constant dense<0.000000e+00> : vector<16x16xf32>
    %117 = tpu.matmul %113, %116, %cst_40 {dimension_numbers = #tpu.dot_dimension_numbers<[1], [0], [0], [1], [0, 0, 1, 1], [], []>} : vector<16x16xf32>, vector<16x16xf32>, vector<16x16xf32> -> vector<16x16xf32>
    %118 = vector.broadcast %11 : f32 to vector<16x16xf32>
    %119 = arith.mulf %117, %118 : vector<16x16xf32>
    %cst_41 = arith.constant -1.000000e+09 : f32
    %120 = vector.broadcast %cst_41 : f32 to vector<16x16xf32>
    %121 = arith.select %9, %120, %119 : vector<16x16xi1>, vector<16x16xf32>
    %cst_42 = arith.constant dense<0xFF800000> : vector<16xf32>
    %122 = vector.multi_reduction <maximumf>, %121, %cst_42 [1] : vector<16x16xf32> to vector<16xf32>
    %123 = vector.shape_cast %122 : vector<16xf32> to vector<16x1xf32>
    %124 = vector.broadcast %123 : vector<16x1xf32> to vector<16x16xf32>
    %125 = arith.subf %121, %124 : vector<16x16xf32>
    %126 = math.exp %125 : vector<16x16xf32>
    %cst_43 = arith.constant dense<0.000000e+00> : vector<16xf32>
    %127 = vector.multi_reduction <add>, %126, %cst_43 [1] : vector<16x16xf32> to vector<16xf32>
    %128 = vector.shape_cast %127 : vector<16xf32> to vector<16x1xf32>
    %129 = tpu.reciprocal %128 {approx = true} : vector<16x1xf32> -> vector<16x1xf32>
    %130 = vector.broadcast %129 : vector<16x1xf32> to vector<16x16xf32>
    %131 = arith.mulf %126, %130 : vector<16x16xf32>
    %cst_44 = arith.constant dense<0.000000e+00> : vector<16x16xf32>
    %132 = tpu.matmul %131, %115, %cst_44 {dimension_numbers = #tpu.dot_dimension_numbers<[1], [0], [0], [1], [0, 0, 1, 1], [], []>} : vector<16x16xf32>, vector<16x16xf32>, vector<16x16xf32> -> vector<16x16xf32>
    %133 = vector.extract_strided_slice %12 {offsets = [0, 96], sizes = [16, 16], strides = [1, 1]} : vector<16x384xf32> to vector<16x16xf32>
    %134 = vector.extract_strided_slice %12 {offsets = [0, 224], sizes = [16, 16], strides = [1, 1]} : vector<16x384xf32> to vector<16x16xf32>
    %135 = vector.extract_strided_slice %12 {offsets = [0, 352], sizes = [16, 16], strides = [1, 1]} : vector<16x384xf32> to vector<16x16xf32>
    %136 = tpu.transpose %134, [1, 0] : vector<16x16xf32> -> vector<16x16xf32>
    %cst_45 = arith.constant dense<0.000000e+00> : vector<16x16xf32>
    %137 = tpu.matmul %133, %136, %cst_45 {dimension_numbers = #tpu.dot_dimension_numbers<[1], [0], [0], [1], [0, 0, 1, 1], [], []>} : vector<16x16xf32>, vector<16x16xf32>, vector<16x16xf32> -> vector<16x16xf32>
    %138 = vector.broadcast %11 : f32 to vector<16x16xf32>
    %139 = arith.mulf %137, %138 : vector<16x16xf32>
    %cst_46 = arith.constant -1.000000e+09 : f32
    %140 = vector.broadcast %cst_46 : f32 to vector<16x16xf32>
    %141 = arith.select %9, %140, %139 : vector<16x16xi1>, vector<16x16xf32>
    %cst_47 = arith.constant dense<0xFF800000> : vector<16xf32>
    %142 = vector.multi_reduction <maximumf>, %141, %cst_47 [1] : vector<16x16xf32> to vector<16xf32>
    %143 = vector.shape_cast %142 : vector<16xf32> to vector<16x1xf32>
    %144 = vector.broadcast %143 : vector<16x1xf32> to vector<16x16xf32>
    %145 = arith.subf %141, %144 : vector<16x16xf32>
    %146 = math.exp %145 : vector<16x16xf32>
    %cst_48 = arith.constant dense<0.000000e+00> : vector<16xf32>
    %147 = vector.multi_reduction <add>, %146, %cst_48 [1] : vector<16x16xf32> to vector<16xf32>
    %148 = vector.shape_cast %147 : vector<16xf32> to vector<16x1xf32>
    %149 = tpu.reciprocal %148 {approx = true} : vector<16x1xf32> -> vector<16x1xf32>
    %150 = vector.broadcast %149 : vector<16x1xf32> to vector<16x16xf32>
    %151 = arith.mulf %146, %150 : vector<16x16xf32>
    %cst_49 = arith.constant dense<0.000000e+00> : vector<16x16xf32>
    %152 = tpu.matmul %151, %135, %cst_49 {dimension_numbers = #tpu.dot_dimension_numbers<[1], [0], [0], [1], [0, 0, 1, 1], [], []>} : vector<16x16xf32>, vector<16x16xf32>, vector<16x16xf32> -> vector<16x16xf32>
    %153 = vector.extract_strided_slice %12 {offsets = [0, 112], sizes = [16, 16], strides = [1, 1]} : vector<16x384xf32> to vector<16x16xf32>
    %154 = vector.extract_strided_slice %12 {offsets = [0, 240], sizes = [16, 16], strides = [1, 1]} : vector<16x384xf32> to vector<16x16xf32>
    %155 = vector.extract_strided_slice %12 {offsets = [0, 368], sizes = [16, 16], strides = [1, 1]} : vector<16x384xf32> to vector<16x16xf32>
    %156 = tpu.transpose %154, [1, 0] : vector<16x16xf32> -> vector<16x16xf32>
    %cst_50 = arith.constant dense<0.000000e+00> : vector<16x16xf32>
    %157 = tpu.matmul %153, %156, %cst_50 {dimension_numbers = #tpu.dot_dimension_numbers<[1], [0], [0], [1], [0, 0, 1, 1], [], []>} : vector<16x16xf32>, vector<16x16xf32>, vector<16x16xf32> -> vector<16x16xf32>
    %158 = vector.broadcast %11 : f32 to vector<16x16xf32>
    %159 = arith.mulf %157, %158 : vector<16x16xf32>
    %cst_51 = arith.constant -1.000000e+09 : f32
    %160 = vector.broadcast %cst_51 : f32 to vector<16x16xf32>
    %161 = arith.select %9, %160, %159 : vector<16x16xi1>, vector<16x16xf32>
    %cst_52 = arith.constant dense<0xFF800000> : vector<16xf32>
    %162 = vector.multi_reduction <maximumf>, %161, %cst_52 [1] : vector<16x16xf32> to vector<16xf32>
    %163 = vector.shape_cast %162 : vector<16xf32> to vector<16x1xf32>
    %164 = vector.broadcast %163 : vector<16x1xf32> to vector<16x16xf32>
    %165 = arith.subf %161, %164 : vector<16x16xf32>
    %166 = math.exp %165 : vector<16x16xf32>
    %cst_53 = arith.constant dense<0.000000e+00> : vector<16xf32>
    %167 = vector.multi_reduction <add>, %166, %cst_53 [1] : vector<16x16xf32> to vector<16xf32>
    %168 = vector.shape_cast %167 : vector<16xf32> to vector<16x1xf32>
    %169 = tpu.reciprocal %168 {approx = true} : vector<16x1xf32> -> vector<16x1xf32>
    %170 = vector.broadcast %169 : vector<16x1xf32> to vector<16x16xf32>
    %171 = arith.mulf %166, %170 : vector<16x16xf32>
    %cst_54 = arith.constant dense<0.000000e+00> : vector<16x16xf32>
    %172 = tpu.matmul %171, %155, %cst_54 {dimension_numbers = #tpu.dot_dimension_numbers<[1], [0], [0], [1], [0, 0, 1, 1], [], []>} : vector<16x16xf32>, vector<16x16xf32>, vector<16x16xf32> -> vector<16x16xf32>
    %173 = tpu.concatenate %32, %52, %72, %92, %112, %132, %152, %172 in 1 : vector<16x16xf32>, vector<16x16xf32>, vector<16x16xf32>, vector<16x16xf32>, vector<16x16xf32>, vector<16x16xf32>, vector<16x16xf32>, vector<16x16xf32> -> vector<16x128xf32>
    %cst_55 = arith.constant dense<0.000000e+00> : vector<16x32xf32>
    %174 = tpu.matmul %173, %2, %cst_55 {dimension_numbers = #tpu.dot_dimension_numbers<[1], [0], [0], [1], [0, 0, 1, 1], [], []>} : vector<16x128xf32>, vector<128x32xf32>, vector<16x32xf32> -> vector<16x32xf32>
    %175 = arith.addf %0, %174 : vector<16x32xf32>
    %cst_56 = arith.constant dense<0.000000e+00> : vector<16xf32>
    %176 = vector.multi_reduction <add>, %175, %cst_56 [1] : vector<16x32xf32> to vector<16xf32>
    %177 = vector.shape_cast %176 : vector<16xf32> to vector<16x1xf32>
    %cst_57 = arith.constant 3.200000e+01 : f32
    %178 = vector.broadcast %cst_57 : f32 to vector<16x1xf32>
    %179 = arith.divf %177, %178 : vector<16x1xf32>
    %180 = vector.broadcast %179 : vector<16x1xf32> to vector<16x32xf32>
    %181 = arith.subf %175, %180 : vector<16x32xf32>
    %182 = vector.broadcast %179 : vector<16x1xf32> to vector<16x32xf32>
    %183 = arith.subf %175, %182 : vector<16x32xf32>
    %184 = arith.mulf %181, %183 : vector<16x32xf32>
    %cst_58 = arith.constant dense<0.000000e+00> : vector<16xf32>
    %185 = vector.multi_reduction <add>, %184, %cst_58 [1] : vector<16x32xf32> to vector<16xf32>
    %186 = vector.shape_cast %185 : vector<16xf32> to vector<16x1xf32>
    %cst_59 = arith.constant 3.200000e+01 : f32
    %187 = vector.broadcast %cst_59 : f32 to vector<16x1xf32>
    %188 = arith.divf %186, %187 : vector<16x1xf32>
    %189 = vector.broadcast %179 : vector<16x1xf32> to vector<16x32xf32>
    %190 = arith.subf %175, %189 : vector<16x32xf32>
    %cst_60 = arith.constant 9.99999974E-6 : f32
    %191 = vector.broadcast %cst_60 : f32 to vector<16x1xf32>
    %192 = arith.addf %188, %191 : vector<16x1xf32>
    %193 = math.rsqrt %192 : vector<16x1xf32>
    %194 = vector.broadcast %193 : vector<16x1xf32> to vector<16x32xf32>
    %195 = arith.mulf %190, %194 : vector<16x32xf32>
    %cst_61 = arith.constant dense<0.000000e+00> : vector<16x64xf32>
    %196 = tpu.matmul %195, %3, %cst_61 {dimension_numbers = #tpu.dot_dimension_numbers<[1], [0], [0], [1], [0, 0, 1, 1], [], []>} : vector<16x32xf32>, vector<32x64xf32>, vector<16x64xf32> -> vector<16x64xf32>
    %cst_62 = arith.constant 0.000000e+00 : f32
    %197 = vector.broadcast %cst_62 : f32 to vector<16x64xf32>
    %198 = arith.maximumf %196, %197 : vector<16x64xf32>
    %cst_63 = arith.constant dense<0.000000e+00> : vector<16x32xf32>
    %199 = tpu.matmul %198, %4, %cst_63 {dimension_numbers = #tpu.dot_dimension_numbers<[1], [0], [0], [1], [0, 0, 1, 1], [], []>} : vector<16x64xf32>, vector<64x32xf32>, vector<16x32xf32> -> vector<16x32xf32>
    %200 = arith.addf %195, %199 : vector<16x32xf32>
    %cst_64 = arith.constant dense<0.000000e+00> : vector<16xf32>
    %201 = vector.multi_reduction <add>, %200, %cst_64 [1] : vector<16x32xf32> to vector<16xf32>
    %202 = vector.shape_cast %201 : vector<16xf32> to vector<16x1xf32>
    %cst_65 = arith.constant 3.200000e+01 : f32
    %203 = vector.broadcast %cst_65 : f32 to vector<16x1xf32>
    %204 = arith.divf %202, %203 : vector<16x1xf32>
    %205 = vector.broadcast %204 : vector<16x1xf32> to vector<16x32xf32>
    %206 = arith.subf %200, %205 : vector<16x32xf32>
    %207 = vector.broadcast %204 : vector<16x1xf32> to vector<16x32xf32>
    %208 = arith.subf %200, %207 : vector<16x32xf32>
    %209 = arith.mulf %206, %208 : vector<16x32xf32>
    %cst_66 = arith.constant dense<0.000000e+00> : vector<16xf32>
    %210 = vector.multi_reduction <add>, %209, %cst_66 [1] : vector<16x32xf32> to vector<16xf32>
    %211 = vector.shape_cast %210 : vector<16xf32> to vector<16x1xf32>
    %cst_67 = arith.constant 3.200000e+01 : f32
    %212 = vector.broadcast %cst_67 : f32 to vector<16x1xf32>
    %213 = arith.divf %211, %212 : vector<16x1xf32>
    %214 = vector.broadcast %204 : vector<16x1xf32> to vector<16x32xf32>
    %215 = arith.subf %200, %214 : vector<16x32xf32>
    %cst_68 = arith.constant 9.99999974E-6 : f32
    %216 = vector.broadcast %cst_68 : f32 to vector<16x1xf32>
    %217 = arith.addf %213, %216 : vector<16x1xf32>
    %218 = math.rsqrt %217 : vector<16x1xf32>
    %219 = vector.broadcast %218 : vector<16x1xf32> to vector<16x32xf32>
    %220 = arith.mulf %215, %219 : vector<16x32xf32>
    %c0_69 = arith.constant 0 : index
    %c0_70 = arith.constant 0 : index
    %221 = vector.load %arg7[%c0_69, %c0_70] : memref<16x32xf32, #tpu.memory_space<vmem>>, vector<16x32xf32>
    tpu.vector_store %arg7[%c0_69, %c0_70], %220 {strides = array<i32>} : memref<16x32xf32, #tpu.memory_space<vmem>>, vector<16x32xf32>,
    return
  }
}

</mosaic_0001>

<llo_original>
// kernel: encoder_forward.1
$region0: #{encoder_forward.1}
  #allocation0 [shape = 'u32[]', space=smem, size = 0x4, offset = 0x4, fixed_abs, tag = 'smem constant byte address 0x4 - core index']
  #allocation1 [shape = 'u32[144,128]{1,0:T(1,128)}', space=vmem, size = 0x12000, scoped, tag = 'internal scratch']
  %s0 = inlined_call_operand.vmem [shape: f32[16,32], index: 0, kind: input, shape index: {}]
  %s1 = inlined_call_operand.vmem [shape: f32[16,1], index: 1, kind: input, shape index: {}]
  %s2 = inlined_call_operand.vmem [shape: f32[1,16], index: 2, kind: input, shape index: {}]
  %s3 = inlined_call_operand.vmem [shape: f32[32,384], index: 3, kind: input, shape index: {}]
  %s4 = inlined_call_operand.vmem [shape: f32[128,32], index: 4, kind: input, shape index: {}]
  %s5 = inlined_call_operand.vmem [shape: f32[32,64], index: 5, kind: input, shape index: {}]
  %s6 = inlined_call_operand.vmem [shape: f32[64,32], index: 6, kind: input, shape index: {}]
  %s7 = inlined_call_operand.hbm [shape: f32[16,32], index: 7, kind: output, shape index: {}]
  %s8 = sld [smem:[#allocation0]]
  $region38: #{encoder_forward.1} parent=0
    _
  %s10 = ssub.s32 1, %s8
  %s11 = scalar_select 0, %s10, %s8
  $region1: #{encoder_forward.1} parent=0
    #allocation2 [shape = 'u8[8192]{0}', space=vmem, size = 0x2000, scoped, tag = 'output window, operand 0, single buffered']
    #allocation3 [shape = 's32[1]{0}', space=sflag, size = 0x4, scoped, tag = 'scoped memory for encoder_forward.1']
    %12 = vsyncpa [#allocation3], 0
    // Predicated region
    $region2: #{encoder_forward.1} parent=1 // pred_check
      _
    $region3: #{encoder_forward.1} parent=1 // pred_check_branch
      %14 = sbr.rel (0) target = $region5
    $region4: #{encoder_forward.1} parent=1 // pred_region
      _
    $region5: #{encoder_forward.1} parent=1 // pred_fallthru
      _
    // Predicated region
    $region6: #{encoder_forward.1} parent=1 // pred_check
      _
    $region7: #{encoder_forward.1} parent=1 // pred_check_branch
      %16 = sbr.rel (0) target = $region9
    $region8: #{encoder_forward.1} parent=1 // pred_region
      _
    $region9: #{encoder_forward.1} parent=1 // pred_fallthru
      _
    // Predicated region
    $region10: #{encoder_forward.1} parent=1 // pred_check
      _
    $region11: #{encoder_forward.1} parent=1 // pred_check_branch
      %18 = sbr.rel (0) target = $region13
    $region12: #{encoder_forward.1} parent=1 // pred_region
      _
    $region13: #{encoder_forward.1} parent=1 // pred_fallthru
      _
    // Predicated region
    $region14: #{encoder_forward.1} parent=1 // pred_check
      _
    $region15: #{encoder_forward.1} parent=1 // pred_check_branch
      %20 = sbr.rel (0) target = $region17
    $region16: #{encoder_forward.1} parent=1 // pred_region
      _
    $region17: #{encoder_forward.1} parent=1 // pred_fallthru
      _
    // Predicated region
    $region18: #{encoder_forward.1} parent=1 // pred_check
      _
    $region19: #{encoder_forward.1} parent=1 // pred_check_branch
      %22 = sbr.rel (0) target = $region21
    $region20: #{encoder_forward.1} parent=1 // pred_region
      _
    $region21: #{encoder_forward.1} parent=1 // pred_fallthru
      _
    // Predicated region
    $region22: #{encoder_forward.1} parent=1 // pred_check
      _
    $region23: #{encoder_forward.1} parent=1 // pred_check_branch
      %24 = sbr.rel (0) target = $region25
    $region24: #{encoder_forward.1} parent=1 // pred_region
      _
    $region25: #{encoder_forward.1} parent=1 // pred_fallthru
      _
    // Predicated region
    $region26: #{encoder_forward.1} parent=1 // pred_check
      _
    $region27: #{encoder_forward.1} parent=1 // pred_check_branch
      %26 = sbr.rel (0) target = $region29
    $region28: #{encoder_forward.1} parent=1 // pred_region
      _
    $region29: #{encoder_forward.1} parent=1 // pred_fallthru
      _
    %v27 = vld [vmem:[%s0] sm:$0xff]
    %v28 = vld [vmem:[%s0 + $0x8] sm:$0xff]
    %v29 = vld [vmem:[%s3] sm:$0xff]
    %v30 = vld [vmem:[%s3 + $0x8] sm:$0xff]
    %v31 = vld [vmem:[%s3 + $0x10] sm:$0xff]
    %v32 = vld [vmem:[%s3 + $0x18] sm:$0xff]
    %v33 = vld [vmem:[%s3 + $0x20] sm:$0xff]
    %v34 = vld [vmem:[%s3 + $0x28] sm:$0xff]
    %v35 = vld [vmem:[%s3 + $0x30] sm:$0xff]
    %v36 = vld [vmem:[%s3 + $0x38] sm:$0xff]
    %v37 = vld [vmem:[%s3 + $0x40] sm:$0xff]
    %v38 = vld [vmem:[%s3 + $0x48] sm:$0xff]
    %v39 = vld [vmem:[%s3 + $0x50] sm:$0xff]
    %v40 = vld [vmem:[%s3 + $0x58] sm:$0xff]
    %v41 = vld [vmem:[%s4] sm:$0xff]
    %v42 = vld [vmem:[%s4 + $0x8] sm:$0xff]
    %v43 = vld [vmem:[%s4 + $0x10] sm:$0xff]
    %v44 = vld [vmem:[%s4 + $0x18] sm:$0xff]
    %v45 = vld [vmem:[%s4 + $0x20] sm:$0xff]
    %v46 = vld [vmem:[%s4 + $0x28] sm:$0xff]
    %v47 = vld [vmem:[%s4 + $0x30] sm:$0xff]
    %v48 = vld [vmem:[%s4 + $0x38] sm:$0xff]
    %v49 = vld [vmem:[%s4 + $0x40] sm:$0xff]
    %v50 = vld [vmem:[%s4 + $0x48] sm:$0xff]
    %v51 = vld [vmem:[%s4 + $0x50] sm:$0xff]
    %v52 = vld [vmem:[%s4 + $0x58] sm:$0xff]
    %v53 = vld [vmem:[%s4 + $0x60] sm:$0xff]
    %v54 = vld [vmem:[%s4 + $0x68] sm:$0xff]
    %v55 = vld [vmem:[%s4 + $0x70] sm:$0xff]
    %v56 = vld [vmem:[%s4 + $0x78] sm:$0xff]
    %v57 = vld [vmem:[%s5] sm:$0xff]
    %v58 = vld [vmem:[%s5 + $0x8] sm:$0xff]
    %v59 = vld [vmem:[%s5 + $0x10] sm:$0xff]
    %v60 = vld [vmem:[%s5 + $0x18] sm:$0xff]
    %v61 = vld [vmem:[%s6] sm:$0xff]
    %v62 = vld [vmem:[%s6 + $0x8] sm:$0xff]
    %v63 = vld [vmem:[%s6 + $0x10] sm:$0xff]
    %v64 = vld [vmem:[%s6 + $0x18] sm:$0xff]
    %v65 = vld [vmem:[%s6 + $0x20] sm:$0xff]
    %v66 = vld [vmem:[%s6 + $0x28] sm:$0xff]
    %v67 = vld [vmem:[%s6 + $0x30] sm:$0xff]
    %v68 = vld [vmem:[%s6 + $0x38] sm:$0xff]
    %v69 = vld [vmem:[%s1] sm:$0xff]
    %v70 = vld [vmem:[%s1 + $0x8] sm:$0xff]
    %v71 = vld [vmem:[%s2] sm:$0x1]
    %73 = vset.pattern.permute.xlu0 0
    %74 = vperm.xlu0 %73, %v69
    %v75 = vpop.permute.xlu0 %74
    %78 = vset.pattern.permute.xlu0 0
    %79 = vperm.xlu0 %78, %v70
    %v80 = vpop.permute.xlu0 %79
    %v83 = vlaneseq
    %v84 = vshrl.u32 %v83, 7
    %v85 = vsub.s32 0, %v84
    %v86 = vrot.slane %v71, %v85
    %vm88 = vcmp.ne.f32.partialorder %v75, %v86
    %vm89 = vcmp.ne.f32.partialorder %v80, %v86
    %vm90 = vcmask 261120
    %v92 = vsel %vm90, %v27, 0
    %v95 = vsel %vm90, %v28, 0
    %97 = vmatprep.subr.mxu0 0.0
    %98 = vmatpush1.msra.mxu0 0.0
    %99 = vmatprep.subr.mxu0 0.0
    %100 = vmatpush1.msra.mxu0 0.0
    %101 = vmatprep.subr.mxu0 0.0
    %102 = vmatpush1.msra.mxu0 0.0
    %103 = vmatprep.subr.mxu0 0.0
    %104 = vmatpush1.msra.mxu0 0.0
    %105 = vmatprep.subr.mxu0 0.0
    %106 = vmatpush1.msra.mxu0 0.0
    %107 = vmatprep.subr.mxu0 0.0
    %108 = vmatpush1.msra.mxu0 0.0
    %109 = vmatprep.subr.mxu0 0.0
    %110 = vmatpush1.msra.mxu0 0.0
    %111 = vmatprep.subr.mxu0 0.0
    %112 = vmatpush1.msra.mxu0 0.0
    %113 = vmatprep.subr.mxu0 0.0
    %114 = vmatpush1.msra.mxu0 0.0
    %115 = vmatprep.subr.mxu0 0.0
    %116 = vmatpush1.msra.mxu0 0.0
    %117 = vmatprep.subr.mxu0 0.0
    %118 = vmatpush1.msra.mxu0 0.0
    %119 = vmatprep.subr.mxu0 0.0
    %120 = vmatpush1.msra.mxu0 0.0
    %121 = vmatprep.subr.mxu0 %v39
    %122 = vmatpush1.msra.mxu0 %v38
    %123 = vmatprep.subr.mxu0 %v36
    %124 = vmatpush1.msra.mxu0 %v35
    %125 = vmatprep.subr.mxu0 %v33
    %126 = vmatpush1.msra.mxu0 %v32
    %127 = vmatprep.subr.mxu0 %v30
    %128 = vmatpush1.msra.mxu0 %v29
    %129 = vmatprep.subr.mxu0 0.0
    %130 = vmatpush2.msra.mxu0 0.0
    %131 = vmatprep.subr.mxu0 0.0
    %132 = vmatpush2.msra.mxu0 0.0
    %133 = vmatprep.subr.mxu0 0.0
    %134 = vmatpush2.msra.mxu0 0.0
    %135 = vmatprep.subr.mxu0 0.0
    %136 = vmatpush2.msra.mxu0 0.0
    %137 = vmatprep.subr.mxu0 0.0
    %138 = vmatpush2.msra.mxu0 0.0
    %139 = vmatprep.subr.mxu0 0.0
    %140 = vmatpush2.msra.mxu0 0.0
    %141 = vmatprep.subr.mxu0 0.0
    %142 = vmatpush2.msra.mxu0 0.0
    %143 = vmatprep.subr.mxu0 0.0
    %144 = vmatpush2.msra.mxu0 0.0
    %145 = vmatprep.subr.mxu0 0.0
    %146 = vmatpush2.msra.mxu0 0.0
    %147 = vmatprep.subr.mxu0 0.0
    %148 = vmatpush2.msra.mxu0 0.0
    %149 = vmatprep.subr.mxu0 0.0
    %150 = vmatpush2.msra.mxu0 0.0
    %151 = vmatprep.subr.mxu0 0.0
    %152 = vmatpush2.msra.mxu0 0.0
    %153 = vmatprep.subr.mxu0 0.0
    %154 = vmatpush2.msra.mxu0 0.0
    %155 = vmatprep.subr.mxu0 0.0
    %156 = vmatpush2.msra.mxu0 0.0
    %157 = vmatprep.subr.mxu0 0.0
    %158 = vmatpush2.msra.mxu0 0.0
    %159 = vmatprep.subr.mxu0 0.0
    %160 = vmatpush2.msra.mxu0 0.0
    %161 = vmatprep.mubr.f32.mxu0 0.0
    %162 = vmatmul.mubr.f32.gmra.mxu0 %v92
    %v163 = vpop.f32.mrf.mxu0
    %v164 = vadd.f32 0.0, %v163
    %v165 = vpop.f32.mrf.mxu0
    %v166 = vadd.f32 0.0, %v165
    %167 = vmatprep.mubr.f32.mxu0 0.0
    %168 = vmatmul.mubr.f32.gmra.mxu0 %v95
    %v169 = vpop.f32.mrf.mxu0
    %v170 = vadd.f32 0.0, %v169
    %v171 = vpop.f32.mrf.mxu0
    %v172 = vadd.f32 0.0, %v171
    %173 = vdwg.mxu0
    %174 = vmatprep.subr.mxu0 0.0
    %175 = vmatpush1.msra.mxu0 0.0
    %176 = vmatprep.subr.mxu0 0.0
    %177 = vmatpush1.msra.mxu0 0.0
    %178 = vmatprep.subr.mxu0 0.0
    %179 = vmatpush1.msra.mxu0 0.0
    %180 = vmatprep.subr.mxu0 0.0
    %181 = vmatpush1.msra.mxu0 0.0
    %182 = vmatprep.subr.mxu0 0.0
    %183 = vmatpush1.msra.mxu0 0.0
    %184 = vmatprep.subr.mxu0 0.0
    %185 = vmatpush1.msra.mxu0 0.0
    %186 = vmatprep.subr.mxu0 0.0
    %187 = vmatpush1.msra.mxu0 0.0
    %188 = vmatprep.subr.mxu0 0.0
    %189 = vmatpush1.msra.mxu0 0.0
    %190 = vmatprep.subr.mxu0 0.0
    %191 = vmatpush1.msra.mxu0 0.0
    %192 = vmatprep.subr.mxu0 0.0
    %193 = vmatpush1.msra.mxu0 0.0
    %194 = vmatprep.subr.mxu0 0.0
    %195 = vmatpush1.msra.mxu0 0.0
    %196 = vmatprep.subr.mxu0 0.0
    %197 = vmatpush1.msra.mxu0 0.0
    %198 = vmatprep.subr.mxu0 0.0
    %199 = vmatpush1.msra.mxu0 %v40
    %200 = vmatprep.subr.mxu0 0.0
    %201 = vmatpush1.msra.mxu0 %v37
    %202 = vmatprep.subr.mxu0 0.0
    %203 = vmatpush1.msra.mxu0 %v34
    %204 = vmatprep.subr.mxu0 0.0
    %205 = vmatpush1.msra.mxu0 %v31
    %206 = vmatprep.subr.mxu0 0.0
    %207 = vmatpush2.msra.mxu0 0.0
    %208 = vmatprep.subr.mxu0 0.0
    %209 = vmatpush2.msra.mxu0 0.0
    %210 = vmatprep.subr.mxu0 0.0
    %211 = vmatpush2.msra.mxu0 0.0
    %212 = vmatprep.subr.mxu0 0.0
    %213 = vmatpush2.msra.mxu0 0.0
    %214 = vmatprep.subr.mxu0 0.0
    %215 = vmatpush2.msra.mxu0 0.0
    %216 = vmatprep.subr.mxu0 0.0
    %217 = vmatpush2.msra.mxu0 0.0
    %218 = vmatprep.subr.mxu0 0.0
    %219 = vmatpush2.msra.mxu0 0.0
    %220 = vmatprep.subr.mxu0 0.0
    %221 = vmatpush2.msra.mxu0 0.0
    %222 = vmatprep.subr.mxu0 0.0
    %223 = vmatpush2.msra.mxu0 0.0
    %224 = vmatprep.subr.mxu0 0.0
    %225 = vmatpush2.msra.mxu0 0.0
    %226 = vmatprep.subr.mxu0 0.0
    %227 = vmatpush2.msra.mxu0 0.0
    %228 = vmatprep.subr.mxu0 0.0
    %229 = vmatpush2.msra.mxu0 0.0
    %230 = vmatprep.subr.mxu0 0.0
    %231 = vmatpush2.msra.mxu0 0.0
    %232 = vmatprep.subr.mxu0 0.0
    %233 = vmatpush2.msra.mxu0 0.0
    %234 = vmatprep.subr.mxu0 0.0
    %235 = vmatpush2.msra.mxu0 0.0
    %236 = vmatprep.subr.mxu0 0.0
    %237 = vmatpush2.msra.mxu0 0.0
    %238 = vmatprep.mubr.f32.mxu0 0.0
    %239 = vmatmul.mubr.f32.gmra.mxu0 %v92
    %v240 = vpop.f32.mrf.mxu0
    %v241 = vadd.f32 0.0, %v240
    %v242 = vpop.f32.mrf.mxu0
    %243 = vmatprep.mubr.f32.mxu0 0.0
    %244 = vmatmul.mubr.f32.gmra.mxu0 %v95
    %v245 = vpop.f32.mrf.mxu0
    %v246 = vadd.f32 0.0, %v245
    %v247 = vpop.f32.mrf.mxu0
    %248 = vdwg.mxu0
    %vm249 = vcmask 130048
    %v251 = vsel %vm249, %v164, 0
    %v254 = vsel %vm249, %v170, 0
    %v257 = vsel %vm249, %v166, 0
    %v260 = vsel %vm249, %v172, 0
    %262 = vmatprep.subr.mxu0 0.0
    %263 = vmatpush1.xpose.msra.mxu0 0.0
    %264 = vmatprep.subr.mxu0 0.0
    %265 = vmatpush1.xpose.msra.mxu0 0.0
    %266 = vmatprep.subr.mxu0 0.0
    %267 = vmatpush1.xpose.msra.mxu0 0.0
    %268 = vmatprep.subr.mxu0 0.0
    %269 = vmatpush1.xpose.msra.mxu0 0.0
    %270 = vmatprep.subr.mxu0 0.0
    %271 = vmatpush1.xpose.msra.mxu0 0.0
    %272 = vmatprep.subr.mxu0 0.0
    %273 = vmatpush1.xpose.msra.mxu0 0.0
    %274 = vmatprep.subr.mxu0 0.0
    %275 = vmatpush1.xpose.msra.mxu0 0.0
    %276 = vmatprep.subr.mxu0 0.0
    %277 = vmatpush1.xpose.msra.mxu0 0.0
    %278 = vmatprep.subr.mxu0 0.0
    %279 = vmatpush1.xpose.msra.mxu0 0.0
    %280 = vmatprep.subr.mxu0 0.0
    %281 = vmatpush1.xpose.msra.mxu0 0.0
    %282 = vmatprep.subr.mxu0 0.0
    %283 = vmatpush1.xpose.msra.mxu0 0.0
    %284 = vmatprep.subr.mxu0 0.0
    %285 = vmatpush1.xpose.msra.mxu0 0.0
    %286 = vmatprep.subr.mxu0 0.0
    %287 = vmatpush1.xpose.msra.mxu0 0.0
    %288 = vmatprep.subr.mxu0 0.0
    %289 = vmatpush1.xpose.msra.mxu0 0.0
    %290 = vmatprep.subr.mxu0 0.0
    %291 = vmatpush1.xpose.msra.mxu0 %v260
    %292 = vmatprep.subr.mxu0 0.0
    %293 = vmatpush1.xpose.msra.mxu0 %v257
    %294 = vmatprep.subr.mxu0 0.0
    %295 = vmatpush2.xpose.msra.mxu0 0.0
    %296 = vmatprep.subr.mxu0 0.0
    %297 = vmatpush2.xpose.msra.mxu0 0.0
    %298 = vmatprep.subr.mxu0 0.0
    %299 = vmatpush2.xpose.msra.mxu0 0.0
    %300 = vmatprep.subr.mxu0 0.0
    %301 = vmatpush2.xpose.msra.mxu0 0.0
    %302 = vmatprep.subr.mxu0 0.0
    %303 = vmatpush2.xpose.msra.mxu0 0.0
    %304 = vmatprep.subr.mxu0 0.0
    %305 = vmatpush2.xpose.msra.mxu0 0.0
    %306 = vmatprep.subr.mxu0 0.0
    %307 = vmatpush2.xpose.msra.mxu0 0.0
    %308 = vmatprep.subr.mxu0 0.0
    %309 = vmatpush2.xpose.msra.mxu0 0.0
    %310 = vmatprep.subr.mxu0 0.0
    %311 = vmatpush2.xpose.msra.mxu0 0.0
    %312 = vmatprep.subr.mxu0 0.0
    %313 = vmatpush2.xpose.msra.mxu0 0.0
    %314 = vmatprep.subr.mxu0 0.0
    %315 = vmatpush2.xpose.msra.mxu0 0.0
    %316 = vmatprep.subr.mxu0 0.0
    %317 = vmatpush2.xpose.msra.mxu0 0.0
    %318 = vmatprep.subr.mxu0 0.0
    %319 = vmatpush2.xpose.msra.mxu0 0.0
    %320 = vmatprep.subr.mxu0 0.0
    %321 = vmatpush2.xpose.msra.mxu0 0.0
    %322 = vmatprep.subr.mxu0 0.0
    %323 = vmatpush2.xpose.msra.mxu0 0.0
    %324 = vmatprep.subr.mxu0 0.0
    %325 = vmatpush2.xpose.msra.mxu0 0.0
    %326 = vmatprep.mubr.f32.mxu0 0.0
    %327 = vmatmul.mubr.f32.gmra.mxu0 %v251
    %v328 = vpop.f32.mrf.mxu0
    %v329 = vadd.f32 0.0, %v328
    %v330 = vpop.f32.mrf.mxu0
    %331 = vmatprep.mubr.f32.mxu0 0.0
    %332 = vmatmul.mubr.f32.gmra.mxu0 %v254
    %v333 = vpop.f32.mrf.mxu0
    %v334 = vadd.f32 0.0, %v333
    %v335 = vpop.f32.mrf.mxu0
    %336 = vdwg.mxu0
    %v337 = vmul.f32 %v329, 0.25
    %v338 = vmul.f32 %v334, 0.25
    %v339 = vsel %vm88, -1e+09, %v337
    %v340 = vsel %vm89, -1e+09, %v338
    %v341 = vsel %vm249, %v339, -inf
    %342 = vmax.xlane.f32.xlu0 %v341
    %v343 = vpop.xlane.xlu0 %342
    %v344 = vsel %vm249, %v340, -inf
    %345 = vmax.xlane.f32.xlu0 %v344
    %v346 = vpop.xlane.xlu0 %345
    %v347 = vsub.f32 %v339, %v343
    %v348 = vsub.f32 %v340, %v346
    %v349 = vmul.f32 %v347, 1.442695
    %v350 = vpow.pop %v349
    %v351 = vmul.f32 %v348, 1.442695
    %v352 = vpow.pop %v351
    %v353 = vsel %vm249, %v350, 0.0
    %354 = vadd.xlane.f32.xlu0 %v353
    %v355 = vpop.xlane.xlu0 %354
    %v356 = vsel %vm249, %v352, 0.0
    %357 = vadd.xlane.f32.xlu0 %v356
    %v358 = vpop.xlane.xlu0 %357
    %v359 = vrcp.pop %v355
    %v360 = vrcp.pop %v358
    %v361 = vmul.f32 %v350, %v359
    %v362 = vmul.f32 %v352, %v360
    %v364 = vsel %vm249, %v361, 0
    %v367 = vsel %vm249, %v362, 0
    %369 = vmatprep.subr.mxu0 0.0
    %370 = vmatpush1.msra.mxu0 0.0
    %371 = vmatprep.subr.mxu0 0.0
    %372 = vmatpush1.msra.mxu0 0.0
    %373 = vmatprep.subr.mxu0 0.0
    %374 = vmatpush1.msra.mxu0 0.0
    %375 = vmatprep.subr.mxu0 0.0
    %376 = vmatpush1.msra.mxu0 0.0
    %377 = vmatprep.subr.mxu0 0.0
    %378 = vmatpush1.msra.mxu0 0.0
    %379 = vmatprep.subr.mxu0 0.0
    %380 = vmatpush1.msra.mxu0 0.0
    %381 = vmatprep.subr.mxu0 0.0
    %382 = vmatpush1.msra.mxu0 0.0
    %383 = vmatprep.subr.mxu0 0.0
    %384 = vmatpush1.msra.mxu0 0.0
    %385 = vmatprep.subr.mxu0 0.0
    %386 = vmatpush1.msra.mxu0 0.0
    %387 = vmatprep.subr.mxu0 0.0
    %388 = vmatpush1.msra.mxu0 0.0
    %389 = vmatprep.subr.mxu0 0.0
    %390 = vmatpush1.msra.mxu0 0.0
    %391 = vmatprep.subr.mxu0 0.0
    %392 = vmatpush1.msra.mxu0 0.0
    %393 = vmatprep.subr.mxu0 0.0
    %394 = vmatpush1.msra.mxu0 0.0
    %395 = vmatprep.subr.mxu0 0.0
    %396 = vmatpush1.msra.mxu0 0.0
    %397 = vmatprep.subr.mxu0 0.0
    %398 = vmatpush1.msra.mxu0 %v246
    %399 = vmatprep.subr.mxu0 0.0
    %400 = vmatpush1.msra.mxu0 %v241
    %401 = vmatprep.subr.mxu0 0.0
    %402 = vmatpush2.msra.mxu0 0.0
    %403 = vmatprep.subr.mxu0 0.0
    %404 = vmatpush2.msra.mxu0 0.0
    %405 = vmatprep.subr.mxu0 0.0
    %406 = vmatpush2.msra.mxu0 0.0
    %407 = vmatprep.subr.mxu0 0.0
    %408 = vmatpush2.msra.mxu0 0.0
    %409 = vmatprep.subr.mxu0 0.0
    %410 = vmatpush2.msra.mxu0 0.0
    %411 = vmatprep.subr.mxu0 0.0
    %412 = vmatpush2.msra.mxu0 0.0
    %413 = vmatprep.subr.mxu0 0.0
    %414 = vmatpush2.msra.mxu0 0.0
    %415 = vmatprep.subr.mxu0 0.0
    %416 = vmatpush2.msra.mxu0 0.0
    %417 = vmatprep.subr.mxu0 0.0
    %418 = vmatpush2.msra.mxu0 0.0
    %419 = vmatprep.subr.mxu0 0.0
    %420 = vmatpush2.msra.mxu0 0.0
    %421 = vmatprep.subr.mxu0 0.0
    %422 = vmatpush2.msra.mxu0 0.0
    %423 = vmatprep.subr.mxu0 0.0
    %424 = vmatpush2.msra.mxu0 0.0
    %425 = vmatprep.subr.mxu0 0.0
    %426 = vmatpush2.msra.mxu0 0.0
    %427 = vmatprep.subr.mxu0 0.0
    %428 = vmatpush2.msra.mxu0 0.0
    %429 = vmatprep.subr.mxu0 0.0
    %430 = vmatpush2.msra.mxu0 0.0
    %431 = vmatprep.subr.mxu0 0.0
    %432 = vmatpush2.msra.mxu0 0.0
    %433 = vmatprep.mubr.f32.mxu0 0.0
    %434 = vmatmul.mubr.f32.gmra.mxu0 %v364
    %v435 = vpop.f32.mrf.mxu0
    %v436 = vadd.f32 0.0, %v435
    %v437 = vpop.f32.mrf.mxu0
    %438 = vmatprep.mubr.f32.mxu0 0.0
    %439 = vmatmul.mubr.f32.gmra.mxu0 %v367
    %v440 = vpop.f32.mrf.mxu0
    %v441 = vadd.f32 0.0, %v440
    %v442 = vpop.f32.mrf.mxu0
    %443 = vdwg.mxu0
    %444 = vrot.lane.b32.xlu0 %v164, 112
    %v445 = vpop.permute.xlu0 %444
    %446 = vrot.lane.b32.xlu0 %v170, 112
    %v447 = vpop.permute.xlu0 %446
    %448 = vrot.lane.b32.xlu0 %v166, 112
    %v449 = vpop.permute.xlu0 %448
    %450 = vrot.lane.b32.xlu0 %v172, 112
    %v451 = vpop.permute.xlu0 %450
    %v452 = vsel %vm249, %v445, 0
    %v454 = vsel %vm249, %v447, 0
    %v456 = vsel %vm249, %v449, 0
    %v458 = vsel %vm249, %v451, 0
    %460 = vmatprep.subr.mxu0 0.0
    %461 = vmatpush1.xpose.msra.mxu0 0.0
    %462 = vmatprep.subr.mxu0 0.0
    %463 = vmatpush1.xpose.msra.mxu0 0.0
    %464 = vmatprep.subr.mxu0 0.0
    %465 = vmatpush1.xpose.msra.mxu0 0.0
    %466 = vmatprep.subr.mxu0 0.0
    %467 = vmatpush1.xpose.msra.mxu0 0.0
    %468 = vmatprep.subr.mxu0 0.0
    %469 = vmatpush1.xpose.msra.mxu0 0.0
    %470 = vmatprep.subr.mxu0 0.0
    %471 = vmatpush1.xpose.msra.mxu0 0.0
    %472 = vmatprep.subr.mxu0 0.0
    %473 = vmatpush1.xpose.msra.mxu0 0.0
    %474 = vmatprep.subr.mxu0 0.0
    %475 = vmatpush1.xpose.msra.mxu0 0.0
    %476 = vmatprep.subr.mxu0 0.0
    %477 = vmatpush1.xpose.msra.mxu0 0.0
    %478 = vmatprep.subr.mxu0 0.0
    %479 = vmatpush1.xpose.msra.mxu0 0.0
    %480 = vmatprep.subr.mxu0 0.0
    %481 = vmatpush1.xpose.msra.mxu0 0.0
    %482 = vmatprep.subr.mxu0 0.0
    %483 = vmatpush1.xpose.msra.mxu0 0.0
    %484 = vmatprep.subr.mxu0 0.0
    %485 = vmatpush1.xpose.msra.mxu0 0.0
    %486 = vmatprep.subr.mxu0 0.0
    %487 = vmatpush1.xpose.msra.mxu0 0.0
    %488 = vmatprep.subr.mxu0 0.0
    %489 = vmatpush1.xpose.msra.mxu0 %v458
    %490 = vmatprep.subr.mxu0 0.0
    %491 = vmatpush1.xpose.msra.mxu0 %v456
    %492 = vmatprep.subr.mxu0 0.0
    %493 = vmatpush2.xpose.msra.mxu0 0.0
    %494 = vmatprep.subr.mxu0 0.0
    %495 = vmatpush2.xpose.msra.mxu0 0.0
    %496 = vmatprep.subr.mxu0 0.0
    %497 = vmatpush2.xpose.msra.mxu0 0.0
    %498 = vmatprep.subr.mxu0 0.0
    %499 = vmatpush2.xpose.msra.mxu0 0.0
    %500 = vmatprep.subr.mxu0 0.0
    %501 = vmatpush2.xpose.msra.mxu0 0.0
    %502 = vmatprep.subr.mxu0 0.0
    %503 = vmatpush2.xpose.msra.mxu0 0.0
    %504 = vmatprep.subr.mxu0 0.0
    %505 = vmatpush2.xpose.msra.mxu0 0.0
    %506 = vmatprep.subr.mxu0 0.0
    %507 = vmatpush2.xpose.msra.mxu0 0.0
    %508 = vmatprep.subr.mxu0 0.0
    %509 = vmatpush2.xpose.msra.mxu0 0.0
    %510 = vmatprep.subr.mxu0 0.0
    %511 = vmatpush2.xpose.msra.mxu0 0.0
    %512 = vmatprep.subr.mxu0 0.0
    %513 = vmatpush2.xpose.msra.mxu0 0.0
    %514 = vmatprep.subr.mxu0 0.0
    %515 = vmatpush2.xpose.msra.mxu0 0.0
    %516 = vmatprep.subr.mxu0 0.0
    %517 = vmatpush2.xpose.msra.mxu0 0.0
    %518 = vmatprep.subr.mxu0 0.0
    %519 = vmatpush2.xpose.msra.mxu0 0.0
    %520 = vmatprep.subr.mxu0 0.0
    %521 = vmatpush2.xpose.msra.mxu0 0.0
    %522 = vmatprep.subr.mxu0 0.0
    %523 = vmatpush2.xpose.msra.mxu0 0.0
    %524 = vmatprep.mubr.f32.mxu0 0.0
    %525 = vmatmul.mubr.f32.gmra.mxu0 %v452
    %v526 = vpop.f32.mrf.mxu0
    %v527 = vadd.f32 0.0, %v526
    %v528 = vpop.f32.mrf.mxu0
    %529 = vmatprep.mubr.f32.mxu0 0.0
    %530 = vmatmul.mubr.f32.gmra.mxu0 %v454
    %v531 = vpop.f32.mrf.mxu0
    %v532 = vadd.f32 0.0, %v531
    %v533 = vpop.f32.mrf.mxu0
    %534 = vdwg.mxu0
    %v535 = vmul.f32 %v527, 0.25
    %v536 = vmul.f32 %v532, 0.25
    %v537 = vsel %vm88, -1e+09, %v535
    %v538 = vsel %vm89, -1e+09, %v536
    %v539 = vsel %vm249, %v537, -inf
    %540 = vmax.xlane.f32.xlu0 %v539
    %v541 = vpop.xlane.xlu0 %540
    %v542 = vsel %vm249, %v538, -inf
    %543 = vmax.xlane.f32.xlu0 %v542
    %v544 = vpop.xlane.xlu0 %543
    %v545 = vsub.f32 %v537, %v541
    %v546 = vsub.f32 %v538, %v544
    %v547 = vmul.f32 %v545, 1.442695
    %v548 = vpow.pop %v547
    %v549 = vmul.f32 %v546, 1.442695
    %v550 = vpow.pop %v549
    %v551 = vsel %vm249, %v548, 0.0
    %552 = vadd.xlane.f32.xlu0 %v551
    %v553 = vpop.xlane.xlu0 %552
    %v554 = vsel %vm249, %v550, 0.0
    %555 = vadd.xlane.f32.xlu0 %v554
    %v556 = vpop.xlane.xlu0 %555
    %v557 = vrcp.pop %v553
    %v558 = vrcp.pop %v556
    %v559 = vmul.f32 %v548, %v557
    %v560 = vmul.f32 %v550, %v558
    %563 = vrot.lane.b32.xlu0 %v241, 112
    %v564 = vpop.permute.xlu0 %563
    %565 = vrot.lane.b32.xlu0 %v246, 112
    %v566 = vpop.permute.xlu0 %565
    %v570 = vsel %vm249, %v559, 0
    %v573 = vsel %vm249, %v560, 0
    %575 = vmatprep.subr.mxu0 0.0
    %576 = vmatpush1.msra.mxu0 0.0
    %577 = vmatprep.subr.mxu0 0.0
    %578 = vmatpush1.msra.mxu0 0.0
    %579 = vmatprep.subr.mxu0 0.0
    %580 = vmatpush1.msra.mxu0 0.0
    %581 = vmatprep.subr.mxu0 0.0
    %582 = vmatpush1.msra.mxu0 0.0
    %583 = vmatprep.subr.mxu0 0.0
    %584 = vmatpush1.msra.mxu0 0.0
    %585 = vmatprep.subr.mxu0 0.0
    %586 = vmatpush1.msra.mxu0 0.0
    %587 = vmatprep.subr.mxu0 0.0
    %588 = vmatpush1.msra.mxu0 0.0
    %589 = vmatprep.subr.mxu0 0.0
    %590 = vmatpush1.msra.mxu0 0.0
    %591 = vmatprep.subr.mxu0 0.0
    %592 = vmatpush1.msra.mxu0 0.0
    %593 = vmatprep.subr.mxu0 0.0
    %594 = vmatpush1.msra.mxu0 0.0
    %595 = vmatprep.subr.mxu0 0.0
    %596 = vmatpush1.msra.mxu0 0.0
    %597 = vmatprep.subr.mxu0 0.0
    %598 = vmatpush1.msra.mxu0 0.0
    %599 = vmatprep.subr.mxu0 0.0
    %600 = vmatpush1.msra.mxu0 0.0
    %601 = vmatprep.subr.mxu0 0.0
    %602 = vmatpush1.msra.mxu0 0.0
    %603 = vmatprep.subr.mxu0 0.0
    %604 = vmatpush1.msra.mxu0 %v566
    %605 = vmatprep.subr.mxu0 0.0
    %606 = vmatpush1.msra.mxu0 %v564
    %607 = vmatprep.subr.mxu0 0.0
    %608 = vmatpush2.msra.mxu0 0.0
    %609 = vmatprep.subr.mxu0 0.0
    %610 = vmatpush2.msra.mxu0 0.0
    %611 = vmatprep.subr.mxu0 0.0
    %612 = vmatpush2.msra.mxu0 0.0
    %613 = vmatprep.subr.mxu0 0.0
    %614 = vmatpush2.msra.mxu0 0.0
    %615 = vmatprep.subr.mxu0 0.0
    %616 = vmatpush2.msra.mxu0 0.0
    %617 = vmatprep.subr.mxu0 0.0
    %618 = vmatpush2.msra.mxu0 0.0
    %619 = vmatprep.subr.mxu0 0.0
    %620 = vmatpush2.msra.mxu0 0.0
    %621 = vmatprep.subr.mxu0 0.0
    %622 = vmatpush2.msra.mxu0 0.0
    %623 = vmatprep.subr.mxu0 0.0
    %624 = vmatpush2.msra.mxu0 0.0
    %625 = vmatprep.subr.mxu0 0.0
    %626 = vmatpush2.msra.mxu0 0.0
    %627 = vmatprep.subr.mxu0 0.0
    %628 = vmatpush2.msra.mxu0 0.0
    %629 = vmatprep.subr.mxu0 0.0
    %630 = vmatpush2.msra.mxu0 0.0
    %631 = vmatprep.subr.mxu0 0.0
    %632 = vmatpush2.msra.mxu0 0.0
    %633 = vmatprep.subr.mxu0 0.0
    %634 = vmatpush2.msra.mxu0 0.0
    %635 = vmatprep.subr.mxu0 0.0
    %636 = vmatpush2.msra.mxu0 0.0
    %637 = vmatprep.subr.mxu0 0.0
    %638 = vmatpush2.msra.mxu0 0.0
    %639 = vmatprep.mubr.f32.mxu0 0.0
    %640 = vmatmul.mubr.f32.gmra.mxu0 %v570
    %v641 = vpop.f32.mrf.mxu0
    %v642 = vadd.f32 0.0, %v641
    %v643 = vpop.f32.mrf.mxu0
    %644 = vmatprep.mubr.f32.mxu0 0.0
    %645 = vmatmul.mubr.f32.gmra.mxu0 %v573
    %v646 = vpop.f32.mrf.mxu0
    %v647 = vadd.f32 0.0, %v646
    %v648 = vpop.f32.mrf.mxu0
    %649 = vdwg.mxu0
    %650 = vrot.lane.b32.xlu0 %v164, 96
    %v651 = vpop.permute.xlu0 %650
    %652 = vrot.lane.b32.xlu0 %v170, 96
    %v653 = vpop.permute.xlu0 %652
    %654 = vrot.lane.b32.xlu0 %v166, 96
    %v655 = vpop.permute.xlu0 %654
    %656 = vrot.lane.b32.xlu0 %v172, 96
    %v657 = vpop.permute.xlu0 %656
    %v658 = vsel %vm249, %v651, 0
    %v660 = vsel %vm249, %v653, 0
    %v662 = vsel %vm249, %v655, 0
    %v664 = vsel %vm249, %v657, 0
    %666 = vmatprep.subr.mxu0 0.0
    %667 = vmatpush1.xpose.msra.mxu0 0.0
    %668 = vmatprep.subr.mxu0 0.0
    %669 = vmatpush1.xpose.msra.mxu0 0.0
    %670 = vmatprep.subr.mxu0 0.0
    %671 = vmatpush1.xpose.msra.mxu0 0.0
    %672 = vmatprep.subr.mxu0 0.0
    %673 = vmatpush1.xpose.msra.mxu0 0.0
    %674 = vmatprep.subr.mxu0 0.0
    %675 = vmatpush1.xpose.msra.mxu0 0.0
    %676 = vmatprep.subr.mxu0 0.0
    %677 = vmatpush1.xpose.msra.mxu0 0.0
    %678 = vmatprep.subr.mxu0 0.0
    %679 = vmatpush1.xpose.msra.mxu0 0.0
    %680 = vmatprep.subr.mxu0 0.0
    %681 = vmatpush1.xpose.msra.mxu0 0.0
    %682 = vmatprep.subr.mxu0 0.0
    %683 = vmatpush1.xpose.msra.mxu0 0.0
    %684 = vmatprep.subr.mxu0 0.0
    %685 = vmatpush1.xpose.msra.mxu0 0.0
    %686 = vmatprep.subr.mxu0 0.0
    %687 = vmatpush1.xpose.msra.mxu0 0.0
    %688 = vmatprep.subr.mxu0 0.0
    %689 = vmatpush1.xpose.msra.mxu0 0.0
    %690 = vmatprep.subr.mxu0 0.0
    %691 = vmatpush1.xpose.msra.mxu0 0.0
    %692 = vmatprep.subr.mxu0 0.0
    %693 = vmatpush1.xpose.msra.mxu0 0.0
    %694 = vmatprep.subr.mxu0 0.0
    %695 = vmatpush1.xpose.msra.mxu0 %v664
    %696 = vmatprep.subr.mxu0 0.0
    %697 = vmatpush1.xpose.msra.mxu0 %v662
    %698 = vmatprep.subr.mxu0 0.0
    %699 = vmatpush2.xpose.msra.mxu0 0.0
    %700 = vmatprep.subr.mxu0 0.0
    %701 = vmatpush2.xpose.msra.mxu0 0.0
    %702 = vmatprep.subr.mxu0 0.0
    %703 = vmatpush2.xpose.msra.mxu0 0.0
    %704 = vmatprep.subr.mxu0 0.0
    %705 = vmatpush2.xpose.msra.mxu0 0.0
    %706 = vmatprep.subr.mxu0 0.0
    %707 = vmatpush2.xpose.msra.mxu0 0.0
    %708 = vmatprep.subr.mxu0 0.0
    %709 = vmatpush2.xpose.msra.mxu0 0.0
    %710 = vmatprep.subr.mxu0 0.0
    %711 = vmatpush2.xpose.msra.mxu0 0.0
    %712 = vmatprep.subr.mxu0 0.0
    %713 = vmatpush2.xpose.msra.mxu0 0.0
    %714 = vmatprep.subr.mxu0 0.0
    %715 = vmatpush2.xpose.msra.mxu0 0.0
    %716 = vmatprep.subr.mxu0 0.0
    %717 = vmatpush2.xpose.msra.mxu0 0.0
    %718 = vmatprep.subr.mxu0 0.0
    %719 = vmatpush2.xpose.msra.mxu0 0.0
    %720 = vmatprep.subr.mxu0 0.0
    %721 = vmatpush2.xpose.msra.mxu0 0.0
    %722 = vmatprep.subr.mxu0 0.0
    %723 = vmatpush2.xpose.msra.mxu0 0.0
    %724 = vmatprep.subr.mxu0 0.0
    %725 = vmatpush2.xpose.msra.mxu0 0.0
    %726 = vmatprep.subr.mxu0 0.0
    %727 = vmatpush2.xpose.msra.mxu0 0.0
    %728 = vmatprep.subr.mxu0 0.0
    %729 = vmatpush2.xpose.msra.mxu0 0.0
    %730 = vmatprep.mubr.f32.mxu0 0.0
    %731 = vmatmul.mubr.f32.gmra.mxu0 %v658
    %v732 = vpop.f32.mrf.mxu0
    %v733 = vadd.f32 0.0, %v732
    %v734 = vpop.f32.mrf.mxu0
    %735 = vmatprep.mubr.f32.mxu0 0.0
    %736 = vmatmul.mubr.f32.gmra.mxu0 %v660
    %v737 = vpop.f32.mrf.mxu0
    %v738 = vadd.f32 0.0, %v737
    %v739 = vpop.f32.mrf.mxu0
    %740 = vdwg.mxu0
    %v741 = vmul.f32 %v733, 0.25
    %v742 = vmul.f32 %v738, 0.25
    %v743 = vsel %vm88, -1e+09, %v741
    %v744 = vsel %vm89, -1e+09, %v742
    %v745 = vsel %vm249, %v743, -inf
    %746 = vmax.xlane.f32.xlu0 %v745
    %v747 = vpop.xlane.xlu0 %746
    %v748 = vsel %vm249, %v744, -inf
    %749 = vmax.xlane.f32.xlu0 %v748
    %v750 = vpop.xlane.xlu0 %749
    %v751 = vsub.f32 %v743, %v747
    %v752 = vsub.f32 %v744, %v750
    %v753 = vmul.f32 %v751, 1.442695
    %v754 = vpow.pop %v753
    %v755 = vmul.f32 %v752, 1.442695
    %v756 = vpow.pop %v755
    %v757 = vsel %vm249, %v754, 0.0
    %758 = vadd.xlane.f32.xlu0 %v757
    %v759 = vpop.xlane.xlu0 %758
    %v760 = vsel %vm249, %v756, 0.0
    %761 = vadd.xlane.f32.xlu0 %v760
    %v762 = vpop.xlane.xlu0 %761
    %v763 = vrcp.pop %v759
    %v764 = vrcp.pop %v762
    %v765 = vmul.f32 %v754, %v763
    %v766 = vmul.f32 %v756, %v764
    %767 = vrot.lane.b32.xlu0 %v241, 96
    %v768 = vpop.permute.xlu0 %767
    %769 = vrot.lane.b32.xlu0 %v246, 96
    %v770 = vpop.permute.xlu0 %769
    %v774 = vsel %vm249, %v765, 0
    %v777 = vsel %vm249, %v766, 0
    %779 = vmatprep.subr.mxu0 0.0
    %780 = vmatpush1.msra.mxu0 0.0
    %781 = vmatprep.subr.mxu0 0.0
    %782 = vmatpush1.msra.mxu0 0.0
    %783 = vmatprep.subr.mxu0 0.0
    %784 = vmatpush1.msra.mxu0 0.0
    %785 = vmatprep.subr.mxu0 0.0
    %786 = vmatpush1.msra.mxu0 0.0
    %787 = vmatprep.subr.mxu0 0.0
    %788 = vmatpush1.msra.mxu0 0.0
    %789 = vmatprep.subr.mxu0 0.0
    %790 = vmatpush1.msra.mxu0 0.0
    %791 = vmatprep.subr.mxu0 0.0
    %792 = vmatpush1.msra.mxu0 0.0
    %793 = vmatprep.subr.mxu0 0.0
    %794 = vmatpush1.msra.mxu0 0.0
    %795 = vmatprep.subr.mxu0 0.0
    %796 = vmatpush1.msra.mxu0 0.0
    %797 = vmatprep.subr.mxu0 0.0
    %798 = vmatpush1.msra.mxu0 0.0
    %799 = vmatprep.subr.mxu0 0.0
    %800 = vmatpush1.msra.mxu0 0.0
    %801 = vmatprep.subr.mxu0 0.0
    %802 = vmatpush1.msra.mxu0 0.0
    %803 = vmatprep.subr.mxu0 0.0
    %804 = vmatpush1.msra.mxu0 0.0
    %805 = vmatprep.subr.mxu0 0.0
    %806 = vmatpush1.msra.mxu0 0.0
    %807 = vmatprep.subr.mxu0 0.0
    %808 = vmatpush1.msra.mxu0 %v770
    %809 = vmatprep.subr.mxu0 0.0
    %810 = vmatpush1.msra.mxu0 %v768
    %811 = vmatprep.subr.mxu0 0.0
    %812 = vmatpush2.msra.mxu0 0.0
    %813 = vmatprep.subr.mxu0 0.0
    %814 = vmatpush2.msra.mxu0 0.0
    %815 = vmatprep.subr.mxu0 0.0
    %816 = vmatpush2.msra.mxu0 0.0
    %817 = vmatprep.subr.mxu0 0.0
    %818 = vmatpush2.msra.mxu0 0.0
    %819 = vmatprep.subr.mxu0 0.0
    %820 = vmatpush2.msra.mxu0 0.0
    %821 = vmatprep.subr.mxu0 0.0
    %822 = vmatpush2.msra.mxu0 0.0
    %823 = vmatprep.subr.mxu0 0.0
    %824 = vmatpush2.msra.mxu0 0.0
    %825 = vmatprep.subr.mxu0 0.0
    %826 = vmatpush2.msra.mxu0 0.0
    %827 = vmatprep.subr.mxu0 0.0
    %828 = vmatpush2.msra.mxu0 0.0
    %829 = vmatprep.subr.mxu0 0.0
    %830 = vmatpush2.msra.mxu0 0.0
    %831 = vmatprep.subr.mxu0 0.0
    %832 = vmatpush2.msra.mxu0 0.0
    %833 = vmatprep.subr.mxu0 0.0
    %834 = vmatpush2.msra.mxu0 0.0
    %835 = vmatprep.subr.mxu0 0.0
    %836 = vmatpush2.msra.mxu0 0.0
    %837 = vmatprep.subr.mxu0 0.0
    %838 = vmatpush2.msra.mxu0 0.0
    %839 = vmatprep.subr.mxu0 0.0
    %840 = vmatpush2.msra.mxu0 0.0
    %841 = vmatprep.subr.mxu0 0.0
    %842 = vmatpush2.msra.mxu0 0.0
    %843 = vmatprep.mubr.f32.mxu0 0.0
    %844 = vmatmul.mubr.f32.gmra.mxu0 %v774
    %v845 = vpop.f32.mrf.mxu0
    %v846 = vadd.f32 0.0, %v845
    %v847 = vpop.f32.mrf.mxu0
    %848 = vmatprep.mubr.f32.mxu0 0.0
    %849 = vmatmul.mubr.f32.gmra.mxu0 %v777
    %v850 = vpop.f32.mrf.mxu0
    %v851 = vadd.f32 0.0, %v850
    %v852 = vpop.f32.mrf.mxu0
    %853 = vdwg.mxu0
    %854 = vrot.lane.b32.xlu0 %v164, 80
    %v855 = vpop.permute.xlu0 %854
    %856 = vrot.lane.b32.xlu0 %v170, 80
    %v857 = vpop.permute.xlu0 %856
    %858 = vrot.lane.b32.xlu0 %v166, 80
    %v859 = vpop.permute.xlu0 %858
    %860 = vrot.lane.b32.xlu0 %v172, 80
    %v861 = vpop.permute.xlu0 %860
    %v862 = vsel %vm249, %v855, 0
    %v864 = vsel %vm249, %v857, 0
    %v866 = vsel %vm249, %v859, 0
    %v868 = vsel %vm249, %v861, 0
    %870 = vmatprep.subr.mxu0 0.0
    %871 = vmatpush1.xpose.msra.mxu0 0.0
    %872 = vmatprep.subr.mxu0 0.0
    %873 = vmatpush1.xpose.msra.mxu0 0.0
    %874 = vmatprep.subr.mxu0 0.0
    %875 = vmatpush1.xpose.msra.mxu0 0.0
    %876 = vmatprep.subr.mxu0 0.0
    %877 = vmatpush1.xpose.msra.mxu0 0.0
    %878 = vmatprep.subr.mxu0 0.0
    %879 = vmatpush1.xpose.msra.mxu0 0.0
    %880 = vmatprep.subr.mxu0 0.0
    %881 = vmatpush1.xpose.msra.mxu0 0.0
    %882 = vmatprep.subr.mxu0 0.0
    %883 = vmatpush1.xpose.msra.mxu0 0.0
    %884 = vmatprep.subr.mxu0 0.0
    %885 = vmatpush1.xpose.msra.mxu0 0.0
    %886 = vmatprep.subr.mxu0 0.0
    %887 = vmatpush1.xpose.msra.mxu0 0.0
    %888 = vmatprep.subr.mxu0 0.0
    %889 = vmatpush1.xpose.msra.mxu0 0.0
    %890 = vmatprep.subr.mxu0 0.0
    %891 = vmatpush1.xpose.msra.mxu0 0.0
    %892 = vmatprep.subr.mxu0 0.0
    %893 = vmatpush1.xpose.msra.mxu0 0.0
    %894 = vmatprep.subr.mxu0 0.0
    %895 = vmatpush1.xpose.msra.mxu0 0.0
    %896 = vmatprep.subr.mxu0 0.0
    %897 = vmatpush1.xpose.msra.mxu0 0.0
    %898 = vmatprep.subr.mxu0 0.0
    %899 = vmatpush1.xpose.msra.mxu0 %v868
    %900 = vmatprep.subr.mxu0 0.0
    %901 = vmatpush1.xpose.msra.mxu0 %v866
    %902 = vmatprep.subr.mxu0 0.0
    %903 = vmatpush2.xpose.msra.mxu0 0.0
    %904 = vmatprep.subr.mxu0 0.0
    %905 = vmatpush2.xpose.msra.mxu0 0.0
    %906 = vmatprep.subr.mxu0 0.0
    %907 = vmatpush2.xpose.msra.mxu0 0.0
    %908 = vmatprep.subr.mxu0 0.0
    %909 = vmatpush2.xpose.msra.mxu0 0.0
    %910 = vmatprep.subr.mxu0 0.0
    %911 = vmatpush2.xpose.msra.mxu0 0.0
    %912 = vmatprep.subr.mxu0 0.0
    %913 = vmatpush2.xpose.msra.mxu0 0.0
    %914 = vmatprep.subr.mxu0 0.0
    %915 = vmatpush2.xpose.msra.mxu0 0.0
    %916 = vmatprep.subr.mxu0 0.0
    %917 = vmatpush2.xpose.msra.mxu0 0.0
    %918 = vmatprep.subr.mxu0 0.0
    %919 = vmatpush2.xpose.msra.mxu0 0.0
    %920 = vmatprep.subr.mxu0 0.0
    %921 = vmatpush2.xpose.msra.mxu0 0.0
    %922 = vmatprep.subr.mxu0 0.0
    %923 = vmatpush2.xpose.msra.mxu0 0.0
    %924 = vmatprep.subr.mxu0 0.0
    %925 = vmatpush2.xpose.msra.mxu0 0.0
    %926 = vmatprep.subr.mxu0 0.0
    %927 = vmatpush2.xpose.msra.mxu0 0.0
    %928 = vmatprep.subr.mxu0 0.0
    %929 = vmatpush2.xpose.msra.mxu0 0.0
    %930 = vmatprep.subr.mxu0 0.0
    %931 = vmatpush2.xpose.msra.mxu0 0.0
    %932 = vmatprep.subr.mxu0 0.0
    %933 = vmatpush2.xpose.msra.mxu0 0.0
    %934 = vmatprep.mubr.f32.mxu0 0.0
    %935 = vmatmul.mubr.f32.gmra.mxu0 %v862
    %v936 = vpop.f32.mrf.mxu0
    %v937 = vadd.f32 0.0, %v936
    %v938 = vpop.f32.mrf.mxu0
    %939 = vmatprep.mubr.f32.mxu0 0.0
    %940 = vmatmul.mubr.f32.gmra.mxu0 %v864
    %v941 = vpop.f32.mrf.mxu0
    %v942 = vadd.f32 0.0, %v941
    %v943 = vpop.f32.mrf.mxu0
    %944 = vdwg.mxu0
    %v945 = vmul.f32 %v937, 0.25
    %v946 = vmul.f32 %v942, 0.25
    %v947 = vsel %vm88, -1e+09, %v945
    %v948 = vsel %vm89, -1e+09, %v946
    %v949 = vsel %vm249, %v947, -inf
    %950 = vmax.xlane.f32.xlu0 %v949
    %v951 = vpop.xlane.xlu0 %950
    %v952 = vsel %vm249, %v948, -inf
    %953 = vmax.xlane.f32.xlu0 %v952
    %v954 = vpop.xlane.xlu0 %953
    %v955 = vsub.f32 %v947, %v951
    %v956 = vsub.f32 %v948, %v954
    %v957 = vmul.f32 %v955, 1.442695
    %v958 = vpow.pop %v957
    %v959 = vmul.f32 %v956, 1.442695
    %v960 = vpow.pop %v959
    %v961 = vsel %vm249, %v958, 0.0
    %962 = vadd.xlane.f32.xlu0 %v961
    %v963 = vpop.xlane.xlu0 %962
    %v964 = vsel %vm249, %v960, 0.0
    %965 = vadd.xlane.f32.xlu0 %v964
    %v966 = vpop.xlane.xlu0 %965
    %v967 = vrcp.pop %v963
    %v968 = vrcp.pop %v966
    %v969 = vmul.f32 %v958, %v967
    %v970 = vmul.f32 %v960, %v968
    %971 = vrot.lane.b32.xlu0 %v241, 80
    %v972 = vpop.permute.xlu0 %971
    %973 = vrot.lane.b32.xlu0 %v246, 80
    %v974 = vpop.permute.xlu0 %973
    %v978 = vsel %vm249, %v969, 0
    %v981 = vsel %vm249, %v970, 0
    %983 = vmatprep.subr.mxu0 0.0
    %984 = vmatpush1.msra.mxu0 0.0
    %985 = vmatprep.subr.mxu0 0.0
    %986 = vmatpush1.msra.mxu0 0.0
    %987 = vmatprep.subr.mxu0 0.0
    %988 = vmatpush1.msra.mxu0 0.0
    %989 = vmatprep.subr.mxu0 0.0
    %990 = vmatpush1.msra.mxu0 0.0
    %991 = vmatprep.subr.mxu0 0.0
    %992 = vmatpush1.msra.mxu0 0.0
    %993 = vmatprep.subr.mxu0 0.0
    %994 = vmatpush1.msra.mxu0 0.0
    %995 = vmatprep.subr.mxu0 0.0
    %996 = vmatpush1.msra.mxu0 0.0
    %997 = vmatprep.subr.mxu0 0.0
    %998 = vmatpush1.msra.mxu0 0.0
    %999 = vmatprep.subr.mxu0 0.0
    %1000 = vmatpush1.msra.mxu0 0.0
    %1001 = vmatprep.subr.mxu0 0.0
    %1002 = vmatpush1.msra.mxu0 0.0
    %1003 = vmatprep.subr.mxu0 0.0
    %1004 = vmatpush1.msra.mxu0 0.0
    %1005 = vmatprep.subr.mxu0 0.0
    %1006 = vmatpush1.msra.mxu0 0.0
    %1007 = vmatprep.subr.mxu0 0.0
    %1008 = vmatpush1.msra.mxu0 0.0
    %1009 = vmatprep.subr.mxu0 0.0
    %1010 = vmatpush1.msra.mxu0 0.0
    %1011 = vmatprep.subr.mxu0 0.0
    %1012 = vmatpush1.msra.mxu0 %v974
    %1013 = vmatprep.subr.mxu0 0.0
    %1014 = vmatpush1.msra.mxu0 %v972
    %1015 = vmatprep.subr.mxu0 0.0
    %1016 = vmatpush2.msra.mxu0 0.0
    %1017 = vmatprep.subr.mxu0 0.0
    %1018 = vmatpush2.msra.mxu0 0.0
    %1019 = vmatprep.subr.mxu0 0.0
    %1020 = vmatpush2.msra.mxu0 0.0
    %1021 = vmatprep.subr.mxu0 0.0
    %1022 = vmatpush2.msra.mxu0 0.0
    %1023 = vmatprep.subr.mxu0 0.0
    %1024 = vmatpush2.msra.mxu0 0.0
    %1025 = vmatprep.subr.mxu0 0.0
    %1026 = vmatpush2.msra.mxu0 0.0
    %1027 = vmatprep.subr.mxu0 0.0
    %1028 = vmatpush2.msra.mxu0 0.0
    %1029 = vmatprep.subr.mxu0 0.0
    %1030 = vmatpush2.msra.mxu0 0.0
    %1031 = vmatprep.subr.mxu0 0.0
    %1032 = vmatpush2.msra.mxu0 0.0
    %1033 = vmatprep.subr.mxu0 0.0
    %1034 = vmatpush2.msra.mxu0 0.0
    %1035 = vmatprep.subr.mxu0 0.0
    %1036 = vmatpush2.msra.mxu0 0.0
    %1037 = vmatprep.subr.mxu0 0.0
    %1038 = vmatpush2.msra.mxu0 0.0
    %1039 = vmatprep.subr.mxu0 0.0
    %1040 = vmatpush2.msra.mxu0 0.0
    %1041 = vmatprep.subr.mxu0 0.0
    %1042 = vmatpush2.msra.mxu0 0.0
    %1043 = vmatprep.subr.mxu0 0.0
    %1044 = vmatpush2.msra.mxu0 0.0
    %1045 = vmatprep.subr.mxu0 0.0
    %1046 = vmatpush2.msra.mxu0 0.0
    %1047 = vmatprep.mubr.f32.mxu0 0.0
    %1048 = vmatmul.mubr.f32.gmra.mxu0 %v978
    %v1049 = vpop.f32.mrf.mxu0
    %v1050 = vadd.f32 0.0, %v1049
    %v1051 = vpop.f32.mrf.mxu0
    %1052 = vmatprep.mubr.f32.mxu0 0.0
    %1053 = vmatmul.mubr.f32.gmra.mxu0 %v981
    %v1054 = vpop.f32.mrf.mxu0
    %v1055 = vadd.f32 0.0, %v1054
    %v1056 = vpop.f32.mrf.mxu0
    %1057 = vdwg.mxu0
    %1058 = vrot.lane.b32.xlu0 %v164, 64
    %v1059 = vpop.permute.xlu0 %1058
    %1060 = vrot.lane.b32.xlu0 %v170, 64
    %v1061 = vpop.permute.xlu0 %1060
    %1062 = vrot.lane.b32.xlu0 %v166, 64
    %v1063 = vpop.permute.xlu0 %1062
    %1064 = vrot.lane.b32.xlu0 %v172, 64
    %v1065 = vpop.permute.xlu0 %1064
    %v1066 = vsel %vm249, %v1059, 0
    %v1068 = vsel %vm249, %v1061, 0
    %v1070 = vsel %vm249, %v1063, 0
    %v1072 = vsel %vm249, %v1065, 0
    %1074 = vmatprep.subr.mxu0 0.0
    %1075 = vmatpush1.xpose.msra.mxu0 0.0
    %1076 = vmatprep.subr.mxu0 0.0
    %1077 = vmatpush1.xpose.msra.mxu0 0.0
    %1078 = vmatprep.subr.mxu0 0.0
    %1079 = vmatpush1.xpose.msra.mxu0 0.0
    %1080 = vmatprep.subr.mxu0 0.0
    %1081 = vmatpush1.xpose.msra.mxu0 0.0
    %1082 = vmatprep.subr.mxu0 0.0
    %1083 = vmatpush1.xpose.msra.mxu0 0.0
    %1084 = vmatprep.subr.mxu0 0.0
    %1085 = vmatpush1.xpose.msra.mxu0 0.0
    %1086 = vmatprep.subr.mxu0 0.0
    %1087 = vmatpush1.xpose.msra.mxu0 0.0
    %1088 = vmatprep.subr.mxu0 0.0
    %1089 = vmatpush1.xpose.msra.mxu0 0.0
    %1090 = vmatprep.subr.mxu0 0.0
    %1091 = vmatpush1.xpose.msra.mxu0 0.0
    %1092 = vmatprep.subr.mxu0 0.0
    %1093 = vmatpush1.xpose.msra.mxu0 0.0
    %1094 = vmatprep.subr.mxu0 0.0
    %1095 = vmatpush1.xpose.msra.mxu0 0.0
    %1096 = vmatprep.subr.mxu0 0.0
    %1097 = vmatpush1.xpose.msra.mxu0 0.0
    %1098 = vmatprep.subr.mxu0 0.0
    %1099 = vmatpush1.xpose.msra.mxu0 0.0
    %1100 = vmatprep.subr.mxu0 0.0
    %1101 = vmatpush1.xpose.msra.mxu0 0.0
    %1102 = vmatprep.subr.mxu0 0.0
    %1103 = vmatpush1.xpose.msra.mxu0 %v1072
    %1104 = vmatprep.subr.mxu0 0.0
    %1105 = vmatpush1.xpose.msra.mxu0 %v1070
    %1106 = vmatprep.subr.mxu0 0.0
    %1107 = vmatpush2.xpose.msra.mxu0 0.0
    %1108 = vmatprep.subr.mxu0 0.0
    %1109 = vmatpush2.xpose.msra.mxu0 0.0
    %1110 = vmatprep.subr.mxu0 0.0
    %1111 = vmatpush2.xpose.msra.mxu0 0.0
    %1112 = vmatprep.subr.mxu0 0.0
    %1113 = vmatpush2.xpose.msra.mxu0 0.0
    %1114 = vmatprep.subr.mxu0 0.0
    %1115 = vmatpush2.xpose.msra.mxu0 0.0
    %1116 = vmatprep.subr.mxu0 0.0
    %1117 = vmatpush2.xpose.msra.mxu0 0.0
    %1118 = vmatprep.subr.mxu0 0.0
    %1119 = vmatpush2.xpose.msra.mxu0 0.0
    %1120 = vmatprep.subr.mxu0 0.0
    %1121 = vmatpush2.xpose.msra.mxu0 0.0
    %1122 = vmatprep.subr.mxu0 0.0
    %1123 = vmatpush2.xpose.msra.mxu0 0.0
    %1124 = vmatprep.subr.mxu0 0.0
    %1125 = vmatpush2.xpose.msra.mxu0 0.0
    %1126 = vmatprep.subr.mxu0 0.0
    %1127 = vmatpush2.xpose.msra.mxu0 0.0
    %1128 = vmatprep.subr.mxu0 0.0
    %1129 = vmatpush2.xpose.msra.mxu0 0.0
    %1130 = vmatprep.subr.mxu0 0.0
    %1131 = vmatpush2.xpose.msra.mxu0 0.0
    %1132 = vmatprep.subr.mxu0 0.0
    %1133 = vmatpush2.xpose.msra.mxu0 0.0
    %1134 = vmatprep.subr.mxu0 0.0
    %1135 = vmatpush2.xpose.msra.mxu0 0.0
    %1136 = vmatprep.subr.mxu0 0.0
    %1137 = vmatpush2.xpose.msra.mxu0 0.0
    %1138 = vmatprep.mubr.f32.mxu0 0.0
    %1139 = vmatmul.mubr.f32.gmra.mxu0 %v1066
    %v1140 = vpop.f32.mrf.mxu0
    %v1141 = vadd.f32 0.0, %v1140
    %v1142 = vpop.f32.mrf.mxu0
    %1143 = vmatprep.mubr.f32.mxu0 0.0
    %1144 = vmatmul.mubr.f32.gmra.mxu0 %v1068
    %v1145 = vpop.f32.mrf.mxu0
    %v1146 = vadd.f32 0.0, %v1145
    %v1147 = vpop.f32.mrf.mxu0
    %1148 = vdwg.mxu0
    %v1149 = vmul.f32 %v1141, 0.25
    %v1150 = vmul.f32 %v1146, 0.25
    %v1151 = vsel %vm88, -1e+09, %v1149
    %v1152 = vsel %vm89, -1e+09, %v1150
    %v1153 = vsel %vm249, %v1151, -inf
    %1154 = vmax.xlane.f32.xlu0 %v1153
    %v1155 = vpop.xlane.xlu0 %1154
    %v1156 = vsel %vm249, %v1152, -inf
    %1157 = vmax.xlane.f32.xlu0 %v1156
    %v1158 = vpop.xlane.xlu0 %1157
    %v1159 = vsub.f32 %v1151, %v1155
    %v1160 = vsub.f32 %v1152, %v1158
    %v1161 = vmul.f32 %v1159, 1.442695
    %v1162 = vpow.pop %v1161
    %v1163 = vmul.f32 %v1160, 1.442695
    %v1164 = vpow.pop %v1163
    %v1165 = vsel %vm249, %v1162, 0.0
    %1166 = vadd.xlane.f32.xlu0 %v1165
    %v1167 = vpop.xlane.xlu0 %1166
    %v1168 = vsel %vm249, %v1164, 0.0
    %1169 = vadd.xlane.f32.xlu0 %v1168
    %v1170 = vpop.xlane.xlu0 %1169
    %v1171 = vrcp.pop %v1167
    %v1172 = vrcp.pop %v1170
    %v1173 = vmul.f32 %v1162, %v1171
    %v1174 = vmul.f32 %v1164, %v1172
    %1175 = vrot.lane.b32.xlu0 %v241, 64
    %v1176 = vpop.permute.xlu0 %1175
    %1177 = vrot.lane.b32.xlu0 %v246, 64
    %v1178 = vpop.permute.xlu0 %1177
    %v1182 = vsel %vm249, %v1173, 0
    %v1185 = vsel %vm249, %v1174, 0
    %1187 = vmatprep.subr.mxu0 0.0
    %1188 = vmatpush1.msra.mxu0 0.0
    %1189 = vmatprep.subr.mxu0 0.0
    %1190 = vmatpush1.msra.mxu0 0.0
    %1191 = vmatprep.subr.mxu0 0.0
    %1192 = vmatpush1.msra.mxu0 0.0
    %1193 = vmatprep.subr.mxu0 0.0
    %1194 = vmatpush1.msra.mxu0 0.0
    %1195 = vmatprep.subr.mxu0 0.0
    %1196 = vmatpush1.msra.mxu0 0.0
    %1197 = vmatprep.subr.mxu0 0.0
    %1198 = vmatpush1.msra.mxu0 0.0
    %1199 = vmatprep.subr.mxu0 0.0
    %1200 = vmatpush1.msra.mxu0 0.0
    %1201 = vmatprep.subr.mxu0 0.0
    %1202 = vmatpush1.msra.mxu0 0.0
    %1203 = vmatprep.subr.mxu0 0.0
    %1204 = vmatpush1.msra.mxu0 0.0
    %1205 = vmatprep.subr.mxu0 0.0
    %1206 = vmatpush1.msra.mxu0 0.0
    %1207 = vmatprep.subr.mxu0 0.0
    %1208 = vmatpush1.msra.mxu0 0.0
    %1209 = vmatprep.subr.mxu0 0.0
    %1210 = vmatpush1.msra.mxu0 0.0
    %1211 = vmatprep.subr.mxu0 0.0
    %1212 = vmatpush1.msra.mxu0 0.0
    %1213 = vmatprep.subr.mxu0 0.0
    %1214 = vmatpush1.msra.mxu0 0.0
    %1215 = vmatprep.subr.mxu0 0.0
    %1216 = vmatpush1.msra.mxu0 %v1178
    %1217 = vmatprep.subr.mxu0 0.0
    %1218 = vmatpush1.msra.mxu0 %v1176
    %1219 = vmatprep.subr.mxu0 0.0
    %1220 = vmatpush2.msra.mxu0 0.0
    %1221 = vmatprep.subr.mxu0 0.0
    %1222 = vmatpush2.msra.mxu0 0.0
    %1223 = vmatprep.subr.mxu0 0.0
    %1224 = vmatpush2.msra.mxu0 0.0
    %1225 = vmatprep.subr.mxu0 0.0
    %1226 = vmatpush2.msra.mxu0 0.0
    %1227 = vmatprep.subr.mxu0 0.0
    %1228 = vmatpush2.msra.mxu0 0.0
    %1229 = vmatprep.subr.mxu0 0.0
    %1230 = vmatpush2.msra.mxu0 0.0
    %1231 = vmatprep.subr.mxu0 0.0
    %1232 = vmatpush2.msra.mxu0 0.0
    %1233 = vmatprep.subr.mxu0 0.0
    %1234 = vmatpush2.msra.mxu0 0.0
    %1235 = vmatprep.subr.mxu0 0.0
    %1236 = vmatpush2.msra.mxu0 0.0
    %1237 = vmatprep.subr.mxu0 0.0
    %1238 = vmatpush2.msra.mxu0 0.0
    %1239 = vmatprep.subr.mxu0 0.0
    %1240 = vmatpush2.msra.mxu0 0.0
    %1241 = vmatprep.subr.mxu0 0.0
    %1242 = vmatpush2.msra.mxu0 0.0
    %1243 = vmatprep.subr.mxu0 0.0
    %1244 = vmatpush2.msra.mxu0 0.0
    %1245 = vmatprep.subr.mxu0 0.0
    %1246 = vmatpush2.msra.mxu0 0.0
    %1247 = vmatprep.subr.mxu0 0.0
    %1248 = vmatpush2.msra.mxu0 0.0
    %1249 = vmatprep.subr.mxu0 0.0
    %1250 = vmatpush2.msra.mxu0 0.0
    %1251 = vmatprep.mubr.f32.mxu0 0.0
    %1252 = vmatmul.mubr.f32.gmra.mxu0 %v1182
    %v1253 = vpop.f32.mrf.mxu0
    %v1254 = vadd.f32 0.0, %v1253
    %v1255 = vpop.f32.mrf.mxu0
    %1256 = vmatprep.mubr.f32.mxu0 0.0
    %1257 = vmatmul.mubr.f32.gmra.mxu0 %v1185
    %v1258 = vpop.f32.mrf.mxu0
    %v1259 = vadd.f32 0.0, %v1258
    %v1260 = vpop.f32.mrf.mxu0
    %1261 = vdwg.mxu0
    %1262 = vrot.lane.b32.xlu0 %v164, 48
    %v1263 = vpop.permute.xlu0 %1262
    %1264 = vrot.lane.b32.xlu0 %v170, 48
    %v1265 = vpop.permute.xlu0 %1264
    %1266 = vrot.lane.b32.xlu0 %v166, 48
    %v1267 = vpop.permute.xlu0 %1266
    %1268 = vrot.lane.b32.xlu0 %v172, 48
    %v1269 = vpop.permute.xlu0 %1268
    %v1270 = vsel %vm249, %v1263, 0
    %v1272 = vsel %vm249, %v1265, 0
    %v1274 = vsel %vm249, %v1267, 0
    %v1276 = vsel %vm249, %v1269, 0
    %1278 = vmatprep.subr.mxu0 0.0
    %1279 = vmatpush1.xpose.msra.mxu0 0.0
    %1280 = vmatprep.subr.mxu0 0.0
    %1281 = vmatpush1.xpose.msra.mxu0 0.0
    %1282 = vmatprep.subr.mxu0 0.0
    %1283 = vmatpush1.xpose.msra.mxu0 0.0
    %1284 = vmatprep.subr.mxu0 0.0
    %1285 = vmatpush1.xpose.msra.mxu0 0.0
    %1286 = vmatprep.subr.mxu0 0.0
    %1287 = vmatpush1.xpose.msra.mxu0 0.0
    %1288 = vmatprep.subr.mxu0 0.0
    %1289 = vmatpush1.xpose.msra.mxu0 0.0
    %1290 = vmatprep.subr.mxu0 0.0
    %1291 = vmatpush1.xpose.msra.mxu0 0.0
    %1292 = vmatprep.subr.mxu0 0.0
    %1293 = vmatpush1.xpose.msra.mxu0 0.0
    %1294 = vmatprep.subr.mxu0 0.0
    %1295 = vmatpush1.xpose.msra.mxu0 0.0
    %1296 = vmatprep.subr.mxu0 0.0
    %1297 = vmatpush1.xpose.msra.mxu0 0.0
    %1298 = vmatprep.subr.mxu0 0.0
    %1299 = vmatpush1.xpose.msra.mxu0 0.0
    %1300 = vmatprep.subr.mxu0 0.0
    %1301 = vmatpush1.xpose.msra.mxu0 0.0
    %1302 = vmatprep.subr.mxu0 0.0
    %1303 = vmatpush1.xpose.msra.mxu0 0.0
    %1304 = vmatprep.subr.mxu0 0.0
    %1305 = vmatpush1.xpose.msra.mxu0 0.0
    %1306 = vmatprep.subr.mxu0 0.0
    %1307 = vmatpush1.xpose.msra.mxu0 %v1276
    %1308 = vmatprep.subr.mxu0 0.0
    %1309 = vmatpush1.xpose.msra.mxu0 %v1274
    %1310 = vmatprep.subr.mxu0 0.0
    %1311 = vmatpush2.xpose.msra.mxu0 0.0
    %1312 = vmatprep.subr.mxu0 0.0
    %1313 = vmatpush2.xpose.msra.mxu0 0.0
    %1314 = vmatprep.subr.mxu0 0.0
    %1315 = vmatpush2.xpose.msra.mxu0 0.0
    %1316 = vmatprep.subr.mxu0 0.0
    %1317 = vmatpush2.xpose.msra.mxu0 0.0
    %1318 = vmatprep.subr.mxu0 0.0
    %1319 = vmatpush2.xpose.msra.mxu0 0.0
    %1320 = vmatprep.subr.mxu0 0.0
    %1321 = vmatpush2.xpose.msra.mxu0 0.0
    %1322 = vmatprep.subr.mxu0 0.0
    %1323 = vmatpush2.xpose.msra.mxu0 0.0
    %1324 = vmatprep.subr.mxu0 0.0
    %1325 = vmatpush2.xpose.msra.mxu0 0.0
    %1326 = vmatprep.subr.mxu0 0.0
    %1327 = vmatpush2.xpose.msra.mxu0 0.0
    %1328 = vmatprep.subr.mxu0 0.0
    %1329 = vmatpush2.xpose.msra.mxu0 0.0
    %1330 = vmatprep.subr.mxu0 0.0
    %1331 = vmatpush2.xpose.msra.mxu0 0.0
    %1332 = vmatprep.subr.mxu0 0.0
    %1333 = vmatpush2.xpose.msra.mxu0 0.0
    %1334 = vmatprep.subr.mxu0 0.0
    %1335 = vmatpush2.xpose.msra.mxu0 0.0
    %1336 = vmatprep.subr.mxu0 0.0
    %1337 = vmatpush2.xpose.msra.mxu0 0.0
    %1338 = vmatprep.subr.mxu0 0.0
    %1339 = vmatpush2.xpose.msra.mxu0 0.0
    %1340 = vmatprep.subr.mxu0 0.0
    %1341 = vmatpush2.xpose.msra.mxu0 0.0
    %1342 = vmatprep.mubr.f32.mxu0 0.0
    %1343 = vmatmul.mubr.f32.gmra.mxu0 %v1270
    %v1344 = vpop.f32.mrf.mxu0
    %v1345 = vadd.f32 0.0, %v1344
    %v1346 = vpop.f32.mrf.mxu0
    %1347 = vmatprep.mubr.f32.mxu0 0.0
    %1348 = vmatmul.mubr.f32.gmra.mxu0 %v1272
    %v1349 = vpop.f32.mrf.mxu0
    %v1350 = vadd.f32 0.0, %v1349
    %v1351 = vpop.f32.mrf.mxu0
    %1352 = vdwg.mxu0
    %v1353 = vmul.f32 %v1345, 0.25
    %v1354 = vmul.f32 %v1350, 0.25
    %v1355 = vsel %vm88, -1e+09, %v1353
    %v1356 = vsel %vm89, -1e+09, %v1354
    %v1357 = vsel %vm249, %v1355, -inf
    %1358 = vmax.xlane.f32.xlu0 %v1357
    %v1359 = vpop.xlane.xlu0 %1358
    %v1360 = vsel %vm249, %v1356, -inf
    %1361 = vmax.xlane.f32.xlu0 %v1360
    %v1362 = vpop.xlane.xlu0 %1361
    %v1363 = vsub.f32 %v1355, %v1359
    %v1364 = vsub.f32 %v1356, %v1362
    %v1365 = vmul.f32 %v1363, 1.442695
    %v1366 = vpow.pop %v1365
    %v1367 = vmul.f32 %v1364, 1.442695
    %v1368 = vpow.pop %v1367
    %v1369 = vsel %vm249, %v1366, 0.0
    %1370 = vadd.xlane.f32.xlu0 %v1369
    %v1371 = vpop.xlane.xlu0 %1370
    %v1372 = vsel %vm249, %v1368, 0.0
    %1373 = vadd.xlane.f32.xlu0 %v1372
    %v1374 = vpop.xlane.xlu0 %1373
    %v1375 = vrcp.pop %v1371
    %v1376 = vrcp.pop %v1374
    %v1377 = vmul.f32 %v1366, %v1375
    %v1378 = vmul.f32 %v1368, %v1376
    %1379 = vrot.lane.b32.xlu0 %v241, 48
    %v1380 = vpop.permute.xlu0 %1379
    %1381 = vrot.lane.b32.xlu0 %v246, 48
    %v1382 = vpop.permute.xlu0 %1381
    %v1386 = vsel %vm249, %v1377, 0
    %v1389 = vsel %vm249, %v1378, 0
    %1391 = vmatprep.subr.mxu0 0.0
    %1392 = vmatpush1.msra.mxu0 0.0
    %1393 = vmatprep.subr.mxu0 0.0
    %1394 = vmatpush1.msra.mxu0 0.0
    %1395 = vmatprep.subr.mxu0 0.0
    %1396 = vmatpush1.msra.mxu0 0.0
    %1397 = vmatprep.subr.mxu0 0.0
    %1398 = vmatpush1.msra.mxu0 0.0
    %1399 = vmatprep.subr.mxu0 0.0
    %1400 = vmatpush1.msra.mxu0 0.0
    %1401 = vmatprep.subr.mxu0 0.0
    %1402 = vmatpush1.msra.mxu0 0.0
    %1403 = vmatprep.subr.mxu0 0.0
    %1404 = vmatpush1.msra.mxu0 0.0
    %1405 = vmatprep.subr.mxu0 0.0
    %1406 = vmatpush1.msra.mxu0 0.0
    %1407 = vmatprep.subr.mxu0 0.0
    %1408 = vmatpush1.msra.mxu0 0.0
    %1409 = vmatprep.subr.mxu0 0.0
    %1410 = vmatpush1.msra.mxu0 0.0
    %1411 = vmatprep.subr.mxu0 0.0
    %1412 = vmatpush1.msra.mxu0 0.0
    %1413 = vmatprep.subr.mxu0 0.0
    %1414 = vmatpush1.msra.mxu0 0.0
    %1415 = vmatprep.subr.mxu0 0.0
    %1416 = vmatpush1.msra.mxu0 0.0
    %1417 = vmatprep.subr.mxu0 0.0
    %1418 = vmatpush1.msra.mxu0 0.0
    %1419 = vmatprep.subr.mxu0 0.0
    %1420 = vmatpush1.msra.mxu0 %v1382
    %1421 = vmatprep.subr.mxu0 0.0
    %1422 = vmatpush1.msra.mxu0 %v1380
    %1423 = vmatprep.subr.mxu0 0.0
    %1424 = vmatpush2.msra.mxu0 0.0
    %1425 = vmatprep.subr.mxu0 0.0
    %1426 = vmatpush2.msra.mxu0 0.0
    %1427 = vmatprep.subr.mxu0 0.0
    %1428 = vmatpush2.msra.mxu0 0.0
    %1429 = vmatprep.subr.mxu0 0.0
    %1430 = vmatpush2.msra.mxu0 0.0
    %1431 = vmatprep.subr.mxu0 0.0
    %1432 = vmatpush2.msra.mxu0 0.0
    %1433 = vmatprep.subr.mxu0 0.0
    %1434 = vmatpush2.msra.mxu0 0.0
    %1435 = vmatprep.subr.mxu0 0.0
    %1436 = vmatpush2.msra.mxu0 0.0
    %1437 = vmatprep.subr.mxu0 0.0
    %1438 = vmatpush2.msra.mxu0 0.0
    %1439 = vmatprep.subr.mxu0 0.0
    %1440 = vmatpush2.msra.mxu0 0.0
    %1441 = vmatprep.subr.mxu0 0.0
    %1442 = vmatpush2.msra.mxu0 0.0
    %1443 = vmatprep.subr.mxu0 0.0
    %1444 = vmatpush2.msra.mxu0 0.0
    %1445 = vmatprep.subr.mxu0 0.0
    %1446 = vmatpush2.msra.mxu0 0.0
    %1447 = vmatprep.subr.mxu0 0.0
    %1448 = vmatpush2.msra.mxu0 0.0
    %1449 = vmatprep.subr.mxu0 0.0
    %1450 = vmatpush2.msra.mxu0 0.0
    %1451 = vmatprep.subr.mxu0 0.0
    %1452 = vmatpush2.msra.mxu0 0.0
    %1453 = vmatprep.subr.mxu0 0.0
    %1454 = vmatpush2.msra.mxu0 0.0
    %1455 = vmatprep.mubr.f32.mxu0 0.0
    %1456 = vmatmul.mubr.f32.gmra.mxu0 %v1386
    %v1457 = vpop.f32.mrf.mxu0
    %v1458 = vadd.f32 0.0, %v1457
    %v1459 = vpop.f32.mrf.mxu0
    %1460 = vmatprep.mubr.f32.mxu0 0.0
    %1461 = vmatmul.mubr.f32.gmra.mxu0 %v1389
    %v1462 = vpop.f32.mrf.mxu0
    %v1463 = vadd.f32 0.0, %v1462
    %v1464 = vpop.f32.mrf.mxu0
    %1465 = vdwg.mxu0
    %1466 = vrot.lane.b32.xlu0 %v164, 32
    %v1467 = vpop.permute.xlu0 %1466
    %1468 = vrot.lane.b32.xlu0 %v170, 32
    %v1469 = vpop.permute.xlu0 %1468
    %1470 = vrot.lane.b32.xlu0 %v166, 32
    %v1471 = vpop.permute.xlu0 %1470
    %1472 = vrot.lane.b32.xlu0 %v172, 32
    %v1473 = vpop.permute.xlu0 %1472
    %v1474 = vsel %vm249, %v1467, 0
    %v1476 = vsel %vm249, %v1469, 0
    %v1478 = vsel %vm249, %v1471, 0
    %v1480 = vsel %vm249, %v1473, 0
    %1482 = vmatprep.subr.mxu0 0.0
    %1483 = vmatpush1.xpose.msra.mxu0 0.0
    %1484 = vmatprep.subr.mxu0 0.0
    %1485 = vmatpush1.xpose.msra.mxu0 0.0
    %1486 = vmatprep.subr.mxu0 0.0
    %1487 = vmatpush1.xpose.msra.mxu0 0.0
    %1488 = vmatprep.subr.mxu0 0.0
    %1489 = vmatpush1.xpose.msra.mxu0 0.0
    %1490 = vmatprep.subr.mxu0 0.0
    %1491 = vmatpush1.xpose.msra.mxu0 0.0
    %1492 = vmatprep.subr.mxu0 0.0
    %1493 = vmatpush1.xpose.msra.mxu0 0.0
    %1494 = vmatprep.subr.mxu0 0.0
    %1495 = vmatpush1.xpose.msra.mxu0 0.0
    %1496 = vmatprep.subr.mxu0 0.0
    %1497 = vmatpush1.xpose.msra.mxu0 0.0
    %1498 = vmatprep.subr.mxu0 0.0
    %1499 = vmatpush1.xpose.msra.mxu0 0.0
    %1500 = vmatprep.subr.mxu0 0.0
    %1501 = vmatpush1.xpose.msra.mxu0 0.0
    %1502 = vmatprep.subr.mxu0 0.0
    %1503 = vmatpush1.xpose.msra.mxu0 0.0
    %1504 = vmatprep.subr.mxu0 0.0
    %1505 = vmatpush1.xpose.msra.mxu0 0.0
    %1506 = vmatprep.subr.mxu0 0.0
    %1507 = vmatpush1.xpose.msra.mxu0 0.0
    %1508 = vmatprep.subr.mxu0 0.0
    %1509 = vmatpush1.xpose.msra.mxu0 0.0
    %1510 = vmatprep.subr.mxu0 0.0
    %1511 = vmatpush1.xpose.msra.mxu0 %v1480
    %1512 = vmatprep.subr.mxu0 0.0
    %1513 = vmatpush1.xpose.msra.mxu0 %v1478
    %1514 = vmatprep.subr.mxu0 0.0
    %1515 = vmatpush2.xpose.msra.mxu0 0.0
    %1516 = vmatprep.subr.mxu0 0.0
    %1517 = vmatpush2.xpose.msra.mxu0 0.0
    %1518 = vmatprep.subr.mxu0 0.0
    %1519 = vmatpush2.xpose.msra.mxu0 0.0
    %1520 = vmatprep.subr.mxu0 0.0
    %1521 = vmatpush2.xpose.msra.mxu0 0.0
    %1522 = vmatprep.subr.mxu0 0.0
    %1523 = vmatpush2.xpose.msra.mxu0 0.0
    %1524 = vmatprep.subr.mxu0 0.0
    %1525 = vmatpush2.xpose.msra.mxu0 0.0
    %1526 = vmatprep.subr.mxu0 0.0
    %1527 = vmatpush2.xpose.msra.mxu0 0.0
    %1528 = vmatprep.subr.mxu0 0.0
    %1529 = vmatpush2.xpose.msra.mxu0 0.0
    %1530 = vmatprep.subr.mxu0 0.0
    %1531 = vmatpush2.xpose.msra.mxu0 0.0
    %1532 = vmatprep.subr.mxu0 0.0
    %1533 = vmatpush2.xpose.msra.mxu0 0.0
    %1534 = vmatprep.subr.mxu0 0.0
    %1535 = vmatpush2.xpose.msra.mxu0 0.0
    %1536 = vmatprep.subr.mxu0 0.0
    %1537 = vmatpush2.xpose.msra.mxu0 0.0
    %1538 = vmatprep.subr.mxu0 0.0
    %1539 = vmatpush2.xpose.msra.mxu0 0.0
    %1540 = vmatprep.subr.mxu0 0.0
    %1541 = vmatpush2.xpose.msra.mxu0 0.0
    %1542 = vmatprep.subr.mxu0 0.0
    %1543 = vmatpush2.xpose.msra.mxu0 0.0
    %1544 = vmatprep.subr.mxu0 0.0
    %1545 = vmatpush2.xpose.msra.mxu0 0.0
    %1546 = vmatprep.mubr.f32.mxu0 0.0
    %1547 = vmatmul.mubr.f32.gmra.mxu0 %v1474
    %v1548 = vpop.f32.mrf.mxu0
    %v1549 = vadd.f32 0.0, %v1548
    %v1550 = vpop.f32.mrf.mxu0
    %1551 = vmatprep.mubr.f32.mxu0 0.0
    %1552 = vmatmul.mubr.f32.gmra.mxu0 %v1476
    %v1553 = vpop.f32.mrf.mxu0
    %v1554 = vadd.f32 0.0, %v1553
    %v1555 = vpop.f32.mrf.mxu0
    %1556 = vdwg.mxu0
    %v1557 = vmul.f32 %v1549, 0.25
    %v1558 = vmul.f32 %v1554, 0.25
    %v1559 = vsel %vm88, -1e+09, %v1557
    %v1560 = vsel %vm89, -1e+09, %v1558
    %v1561 = vsel %vm249, %v1559, -inf
    %1562 = vmax.xlane.f32.xlu0 %v1561
    %v1563 = vpop.xlane.xlu0 %1562
    %v1564 = vsel %vm249, %v1560, -inf
    %1565 = vmax.xlane.f32.xlu0 %v1564
    %v1566 = vpop.xlane.xlu0 %1565
    %v1567 = vsub.f32 %v1559, %v1563
    %v1568 = vsub.f32 %v1560, %v1566
    %v1569 = vmul.f32 %v1567, 1.442695
    %v1570 = vpow.pop %v1569
    %v1571 = vmul.f32 %v1568, 1.442695
    %v1572 = vpow.pop %v1571
    %v1573 = vsel %vm249, %v1570, 0.0
    %1574 = vadd.xlane.f32.xlu0 %v1573
    %v1575 = vpop.xlane.xlu0 %1574
    %v1576 = vsel %vm249, %v1572, 0.0
    %1577 = vadd.xlane.f32.xlu0 %v1576
    %v1578 = vpop.xlane.xlu0 %1577
    %v1579 = vrcp.pop %v1575
    %v1580 = vrcp.pop %v1578
    %v1581 = vmul.f32 %v1570, %v1579
    %v1582 = vmul.f32 %v1572, %v1580
    %1583 = vrot.lane.b32.xlu0 %v241, 32
    %v1584 = vpop.permute.xlu0 %1583
    %1585 = vrot.lane.b32.xlu0 %v246, 32
    %v1586 = vpop.permute.xlu0 %1585
    %v1590 = vsel %vm249, %v1581, 0
    %v1593 = vsel %vm249, %v1582, 0
    %1595 = vmatprep.subr.mxu0 0.0
    %1596 = vmatpush1.msra.mxu0 0.0
    %1597 = vmatprep.subr.mxu0 0.0
    %1598 = vmatpush1.msra.mxu0 0.0
    %1599 = vmatprep.subr.mxu0 0.0
    %1600 = vmatpush1.msra.mxu0 0.0
    %1601 = vmatprep.subr.mxu0 0.0
    %1602 = vmatpush1.msra.mxu0 0.0
    %1603 = vmatprep.subr.mxu0 0.0
    %1604 = vmatpush1.msra.mxu0 0.0
    %1605 = vmatprep.subr.mxu0 0.0
    %1606 = vmatpush1.msra.mxu0 0.0
    %1607 = vmatprep.subr.mxu0 0.0
    %1608 = vmatpush1.msra.mxu0 0.0
    %1609 = vmatprep.subr.mxu0 0.0
    %1610 = vmatpush1.msra.mxu0 0.0
    %1611 = vmatprep.subr.mxu0 0.0
    %1612 = vmatpush1.msra.mxu0 0.0
    %1613 = vmatprep.subr.mxu0 0.0
    %1614 = vmatpush1.msra.mxu0 0.0
    %1615 = vmatprep.subr.mxu0 0.0
    %1616 = vmatpush1.msra.mxu0 0.0
    %1617 = vmatprep.subr.mxu0 0.0
    %1618 = vmatpush1.msra.mxu0 0.0
    %1619 = vmatprep.subr.mxu0 0.0
    %1620 = vmatpush1.msra.mxu0 0.0
    %1621 = vmatprep.subr.mxu0 0.0
    %1622 = vmatpush1.msra.mxu0 0.0
    %1623 = vmatprep.subr.mxu0 0.0
    %1624 = vmatpush1.msra.mxu0 %v1586
    %1625 = vmatprep.subr.mxu0 0.0
    %1626 = vmatpush1.msra.mxu0 %v1584
    %1627 = vmatprep.subr.mxu0 0.0
    %1628 = vmatpush2.msra.mxu0 0.0
    %1629 = vmatprep.subr.mxu0 0.0
    %1630 = vmatpush2.msra.mxu0 0.0
    %1631 = vmatprep.subr.mxu0 0.0
    %1632 = vmatpush2.msra.mxu0 0.0
    %1633 = vmatprep.subr.mxu0 0.0
    %1634 = vmatpush2.msra.mxu0 0.0
    %1635 = vmatprep.subr.mxu0 0.0
    %1636 = vmatpush2.msra.mxu0 0.0
    %1637 = vmatprep.subr.mxu0 0.0
    %1638 = vmatpush2.msra.mxu0 0.0
    %1639 = vmatprep.subr.mxu0 0.0
    %1640 = vmatpush2.msra.mxu0 0.0
    %1641 = vmatprep.subr.mxu0 0.0
    %1642 = vmatpush2.msra.mxu0 0.0
    %1643 = vmatprep.subr.mxu0 0.0
    %1644 = vmatpush2.msra.mxu0 0.0
    %1645 = vmatprep.subr.mxu0 0.0
    %1646 = vmatpush2.msra.mxu0 0.0
    %1647 = vmatprep.subr.mxu0 0.0
    %1648 = vmatpush2.msra.mxu0 0.0
    %1649 = vmatprep.subr.mxu0 0.0
    %1650 = vmatpush2.msra.mxu0 0.0
    %1651 = vmatprep.subr.mxu0 0.0
    %1652 = vmatpush2.msra.mxu0 0.0
    %1653 = vmatprep.subr.mxu0 0.0
    %1654 = vmatpush2.msra.mxu0 0.0
    %1655 = vmatprep.subr.mxu0 0.0
    %1656 = vmatpush2.msra.mxu0 0.0
    %1657 = vmatprep.subr.mxu0 0.0
    %1658 = vmatpush2.msra.mxu0 0.0
    %1659 = vmatprep.mubr.f32.mxu0 0.0
    %1660 = vmatmul.mubr.f32.gmra.mxu0 %v1590
    %v1661 = vpop.f32.mrf.mxu0
    %v1662 = vadd.f32 0.0, %v1661
    %v1663 = vpop.f32.mrf.mxu0
    %1664 = vmatprep.mubr.f32.mxu0 0.0
    %1665 = vmatmul.mubr.f32.gmra.mxu0 %v1593
    %v1666 = vpop.f32.mrf.mxu0
    %v1667 = vadd.f32 0.0, %v1666
    %v1668 = vpop.f32.mrf.mxu0
    %1669 = vdwg.mxu0
    %1670 = vrot.lane.b32.xlu0 %v164, 16
    %v1671 = vpop.permute.xlu0 %1670
    %1672 = vrot.lane.b32.xlu0 %v170, 16
    %v1673 = vpop.permute.xlu0 %1672
    %1674 = vrot.lane.b32.xlu0 %v166, 16
    %v1675 = vpop.permute.xlu0 %1674
    %1676 = vrot.lane.b32.xlu0 %v172, 16
    %v1677 = vpop.permute.xlu0 %1676
    %v1678 = vsel %vm249, %v1671, 0
    %v1680 = vsel %vm249, %v1673, 0
    %v1682 = vsel %vm249, %v1675, 0
    %v1684 = vsel %vm249, %v1677, 0
    %1686 = vmatprep.subr.mxu0 0.0
    %1687 = vmatpush1.xpose.msra.mxu0 0.0
    %1688 = vmatprep.subr.mxu0 0.0
    %1689 = vmatpush1.xpose.msra.mxu0 0.0
    %1690 = vmatprep.subr.mxu0 0.0
    %1691 = vmatpush1.xpose.msra.mxu0 0.0
    %1692 = vmatprep.subr.mxu0 0.0
    %1693 = vmatpush1.xpose.msra.mxu0 0.0
    %1694 = vmatprep.subr.mxu0 0.0
    %1695 = vmatpush1.xpose.msra.mxu0 0.0
    %1696 = vmatprep.subr.mxu0 0.0
    %1697 = vmatpush1.xpose.msra.mxu0 0.0
    %1698 = vmatprep.subr.mxu0 0.0
    %1699 = vmatpush1.xpose.msra.mxu0 0.0
    %1700 = vmatprep.subr.mxu0 0.0
    %1701 = vmatpush1.xpose.msra.mxu0 0.0
    %1702 = vmatprep.subr.mxu0 0.0
    %1703 = vmatpush1.xpose.msra.mxu0 0.0
    %1704 = vmatprep.subr.mxu0 0.0
    %1705 = vmatpush1.xpose.msra.mxu0 0.0
    %1706 = vmatprep.subr.mxu0 0.0
    %1707 = vmatpush1.xpose.msra.mxu0 0.0
    %1708 = vmatprep.subr.mxu0 0.0
    %1709 = vmatpush1.xpose.msra.mxu0 0.0
    %1710 = vmatprep.subr.mxu0 0.0
    %1711 = vmatpush1.xpose.msra.mxu0 0.0
    %1712 = vmatprep.subr.mxu0 0.0
    %1713 = vmatpush1.xpose.msra.mxu0 0.0
    %1714 = vmatprep.subr.mxu0 0.0
    %1715 = vmatpush1.xpose.msra.mxu0 %v1684
    %1716 = vmatprep.subr.mxu0 0.0
    %1717 = vmatpush1.xpose.msra.mxu0 %v1682
    %1718 = vmatprep.subr.mxu0 0.0
    %1719 = vmatpush2.xpose.msra.mxu0 0.0
    %1720 = vmatprep.subr.mxu0 0.0
    %1721 = vmatpush2.xpose.msra.mxu0 0.0
    %1722 = vmatprep.subr.mxu0 0.0
    %1723 = vmatpush2.xpose.msra.mxu0 0.0
    %1724 = vmatprep.subr.mxu0 0.0
    %1725 = vmatpush2.xpose.msra.mxu0 0.0
    %1726 = vmatprep.subr.mxu0 0.0
    %1727 = vmatpush2.xpose.msra.mxu0 0.0
    %1728 = vmatprep.subr.mxu0 0.0
    %1729 = vmatpush2.xpose.msra.mxu0 0.0
    %1730 = vmatprep.subr.mxu0 0.0
    %1731 = vmatpush2.xpose.msra.mxu0 0.0
    %1732 = vmatprep.subr.mxu0 0.0
    %1733 = vmatpush2.xpose.msra.mxu0 0.0
    %1734 = vmatprep.subr.mxu0 0.0
    %1735 = vmatpush2.xpose.msra.mxu0 0.0
    %1736 = vmatprep.subr.mxu0 0.0
    %1737 = vmatpush2.xpose.msra.mxu0 0.0
    %1738 = vmatprep.subr.mxu0 0.0
    %1739 = vmatpush2.xpose.msra.mxu0 0.0
    %1740 = vmatprep.subr.mxu0 0.0
    %1741 = vmatpush2.xpose.msra.mxu0 0.0
    %1742 = vmatprep.subr.mxu0 0.0
    %1743 = vmatpush2.xpose.msra.mxu0 0.0
    %1744 = vmatprep.subr.mxu0 0.0
    %1745 = vmatpush2.xpose.msra.mxu0 0.0
    %1746 = vmatprep.subr.mxu0 0.0
    %1747 = vmatpush2.xpose.msra.mxu0 0.0
    %1748 = vmatprep.subr.mxu0 0.0
    %1749 = vmatpush2.xpose.msra.mxu0 0.0
    %1750 = vmatprep.mubr.f32.mxu0 0.0
    %1751 = vmatmul.mubr.f32.gmra.mxu0 %v1678
    %v1752 = vpop.f32.mrf.mxu0
    %v1753 = vadd.f32 0.0, %v1752
    %v1754 = vpop.f32.mrf.mxu0
    %1755 = vmatprep.mubr.f32.mxu0 0.0
    %1756 = vmatmul.mubr.f32.gmra.mxu0 %v1680
    %v1757 = vpop.f32.mrf.mxu0
    %v1758 = vadd.f32 0.0, %v1757
    %v1759 = vpop.f32.mrf.mxu0
    %1760 = vdwg.mxu0
    %v1761 = vmul.f32 %v1753, 0.25
    %v1762 = vmul.f32 %v1758, 0.25
    %v1763 = vsel %vm88, -1e+09, %v1761
    %v1764 = vsel %vm89, -1e+09, %v1762
    %v1765 = vsel %vm249, %v1763, -inf
    %1766 = vmax.xlane.f32.xlu0 %v1765
    %v1767 = vpop.xlane.xlu0 %1766
    %v1768 = vsel %vm249, %v1764, -inf
    %1769 = vmax.xlane.f32.xlu0 %v1768
    %v1770 = vpop.xlane.xlu0 %1769
    %v1771 = vsub.f32 %v1763, %v1767
    %v1772 = vsub.f32 %v1764, %v1770
    %v1773 = vmul.f32 %v1771, 1.442695
    %v1774 = vpow.pop %v1773
    %v1775 = vmul.f32 %v1772, 1.442695
    %v1776 = vpow.pop %v1775
    %v1777 = vsel %vm249, %v1774, 0.0
    %1778 = vadd.xlane.f32.xlu0 %v1777
    %v1779 = vpop.xlane.xlu0 %1778
    %v1780 = vsel %vm249, %v1776, 0.0
    %1781 = vadd.xlane.f32.xlu0 %v1780
    %v1782 = vpop.xlane.xlu0 %1781
    %v1783 = vrcp.pop %v1779
    %v1784 = vrcp.pop %v1782
    %v1785 = vmul.f32 %v1774, %v1783
    %v1786 = vmul.f32 %v1776, %v1784
    %1787 = vrot.lane.b32.xlu0 %v241, 16
    %v1788 = vpop.permute.xlu0 %1787
    %1789 = vrot.lane.b32.xlu0 %v246, 16
    %v1790 = vpop.permute.xlu0 %1789
    %v1794 = vsel %vm249, %v1785, 0
    %v1797 = vsel %vm249, %v1786, 0
    %1799 = vmatprep.subr.mxu0 0.0
    %1800 = vmatpush1.msra.mxu0 0.0
    %1801 = vmatprep.subr.mxu0 0.0
    %1802 = vmatpush1.msra.mxu0 0.0
    %1803 = vmatprep.subr.mxu0 0.0
    %1804 = vmatpush1.msra.mxu0 0.0
    %1805 = vmatprep.subr.mxu0 0.0
    %1806 = vmatpush1.msra.mxu0 0.0
    %1807 = vmatprep.subr.mxu0 0.0
    %1808 = vmatpush1.msra.mxu0 0.0
    %1809 = vmatprep.subr.mxu0 0.0
    %1810 = vmatpush1.msra.mxu0 0.0
    %1811 = vmatprep.subr.mxu0 0.0
    %1812 = vmatpush1.msra.mxu0 0.0
    %1813 = vmatprep.subr.mxu0 0.0
    %1814 = vmatpush1.msra.mxu0 0.0
    %1815 = vmatprep.subr.mxu0 0.0
    %1816 = vmatpush1.msra.mxu0 0.0
    %1817 = vmatprep.subr.mxu0 0.0
    %1818 = vmatpush1.msra.mxu0 0.0
    %1819 = vmatprep.subr.mxu0 0.0
    %1820 = vmatpush1.msra.mxu0 0.0
    %1821 = vmatprep.subr.mxu0 0.0
    %1822 = vmatpush1.msra.mxu0 0.0
    %1823 = vmatprep.subr.mxu0 0.0
    %1824 = vmatpush1.msra.mxu0 0.0
    %1825 = vmatprep.subr.mxu0 0.0
    %1826 = vmatpush1.msra.mxu0 0.0
    %1827 = vmatprep.subr.mxu0 0.0
    %1828 = vmatpush1.msra.mxu0 %v1790
    %1829 = vmatprep.subr.mxu0 0.0
    %1830 = vmatpush1.msra.mxu0 %v1788
    %1831 = vmatprep.subr.mxu0 0.0
    %1832 = vmatpush2.msra.mxu0 0.0
    %1833 = vmatprep.subr.mxu0 0.0
    %1834 = vmatpush2.msra.mxu0 0.0
    %1835 = vmatprep.subr.mxu0 0.0
    %1836 = vmatpush2.msra.mxu0 0.0
    %1837 = vmatprep.subr.mxu0 0.0
    %1838 = vmatpush2.msra.mxu0 0.0
    %1839 = vmatprep.subr.mxu0 0.0
    %1840 = vmatpush2.msra.mxu0 0.0
    %1841 = vmatprep.subr.mxu0 0.0
    %1842 = vmatpush2.msra.mxu0 0.0
    %1843 = vmatprep.subr.mxu0 0.0
    %1844 = vmatpush2.msra.mxu0 0.0
    %1845 = vmatprep.subr.mxu0 0.0
    %1846 = vmatpush2.msra.mxu0 0.0
    %1847 = vmatprep.subr.mxu0 0.0
    %1848 = vmatpush2.msra.mxu0 0.0
    %1849 = vmatprep.subr.mxu0 0.0
    %1850 = vmatpush2.msra.mxu0 0.0
    %1851 = vmatprep.subr.mxu0 0.0
    %1852 = vmatpush2.msra.mxu0 0.0
    %1853 = vmatprep.subr.mxu0 0.0
    %1854 = vmatpush2.msra.mxu0 0.0
    %1855 = vmatprep.subr.mxu0 0.0
    %1856 = vmatpush2.msra.mxu0 0.0
    %1857 = vmatprep.subr.mxu0 0.0
    %1858 = vmatpush2.msra.mxu0 0.0
    %1859 = vmatprep.subr.mxu0 0.0
    %1860 = vmatpush2.msra.mxu0 0.0
    %1861 = vmatprep.subr.mxu0 0.0
    %1862 = vmatpush2.msra.mxu0 0.0
    %1863 = vmatprep.mubr.f32.mxu0 0.0
    %1864 = vmatmul.mubr.f32.gmra.mxu0 %v1794
    %v1865 = vpop.f32.mrf.mxu0
    %v1866 = vadd.f32 0.0, %v1865
    %v1867 = vpop.f32.mrf.mxu0
    %1868 = vmatprep.mubr.f32.mxu0 0.0
    %1869 = vmatmul.mubr.f32.gmra.mxu0 %v1797
    %v1870 = vpop.f32.mrf.mxu0
    %v1871 = vadd.f32 0.0, %v1870
    %v1872 = vpop.f32.mrf.mxu0
    %1873 = vdwg.mxu0
    %1876 = vrot.lane.b32.xlu0 %v642, 16
    %v1877 = vpop.permute.xlu0 %1876
    %1878 = vrot.lane.b32.xlu0 %v647, 16
    %v1879 = vpop.permute.xlu0 %1878
    %1884 = vrot.lane.b32.xlu0 %v846, 32
    %v1885 = vpop.permute.xlu0 %1884
    %1886 = vrot.lane.b32.xlu0 %v851, 32
    %v1887 = vpop.permute.xlu0 %1886
    %1892 = vrot.lane.b32.xlu0 %v1050, 48
    %v1893 = vpop.permute.xlu0 %1892
    %1894 = vrot.lane.b32.xlu0 %v1055, 48
    %v1895 = vpop.permute.xlu0 %1894
    %1900 = vrot.lane.b32.xlu0 %v1254, 64
    %v1901 = vpop.permute.xlu0 %1900
    %1902 = vrot.lane.b32.xlu0 %v1259, 64
    %v1903 = vpop.permute.xlu0 %1902
    %1908 = vrot.lane.b32.xlu0 %v1458, 80
    %v1909 = vpop.permute.xlu0 %1908
    %1910 = vrot.lane.b32.xlu0 %v1463, 80
    %v1911 = vpop.permute.xlu0 %1910
    %1916 = vrot.lane.b32.xlu0 %v1662, 96
    %v1917 = vpop.permute.xlu0 %1916
    %1918 = vrot.lane.b32.xlu0 %v1667, 96
    %v1919 = vpop.permute.xlu0 %1918
    %1924 = vrot.lane.b32.xlu0 %v1866, 112
    %v1925 = vpop.permute.xlu0 %1924
    %1926 = vrot.lane.b32.xlu0 %v1871, 112
    %v1927 = vpop.permute.xlu0 %1926
    %v1930 = vsel %vm249, %v436, %v1877
    %v1931 = vsel %vm249, %v441, %v1879
    %v1932 = vsel %vm90, %v1930, %v1885
    %v1933 = vsel %vm90, %v1931, %v1887
    %vm1934 = vcmask 392192
    %v1935 = vsel %vm1934, %v1932, %v1893
    %v1936 = vsel %vm1934, %v1933, %v1895
    %vm1937 = vcmask 523264
    %v1938 = vsel %vm1937, %v1935, %v1901
    %v1939 = vsel %vm1937, %v1936, %v1903
    %vm1940 = vcmask 654336
    %v1941 = vsel %vm1940, %v1938, %v1909
    %v1942 = vsel %vm1940, %v1939, %v1911
    %vm1943 = vcmask 785408
    %v1944 = vsel %vm1943, %v1941, %v1917
    %v1945 = vsel %vm1943, %v1942, %v1919
    %vm1946 = vcmask 916480
    %v1947 = vsel %vm1946, %v1944, %v1925
    %v1948 = vsel %vm1946, %v1945, %v1927
    %1949 = vmatprep.subr.mxu0 0.0
    %1950 = vmatpush1.msra.mxu0 %v56
    %1951 = vmatprep.subr.mxu0 0.0
    %1952 = vmatpush1.msra.mxu0 %v55
    %1953 = vmatprep.subr.mxu0 0.0
    %1954 = vmatpush1.msra.mxu0 %v54
    %1955 = vmatprep.subr.mxu0 0.0
    %1956 = vmatpush1.msra.mxu0 %v53
    %1957 = vmatprep.subr.mxu0 0.0
    %1958 = vmatpush1.msra.mxu0 %v52
    %1959 = vmatprep.subr.mxu0 0.0
    %1960 = vmatpush1.msra.mxu0 %v51
    %1961 = vmatprep.subr.mxu0 0.0
    %1962 = vmatpush1.msra.mxu0 %v50
    %1963 = vmatprep.subr.mxu0 0.0
    %1964 = vmatpush1.msra.mxu0 %v49
    %1965 = vmatprep.subr.mxu0 0.0
    %1966 = vmatpush1.msra.mxu0 %v48
    %1967 = vmatprep.subr.mxu0 0.0
    %1968 = vmatpush1.msra.mxu0 %v47
    %1969 = vmatprep.subr.mxu0 0.0
    %1970 = vmatpush1.msra.mxu0 %v46
    %1971 = vmatprep.subr.mxu0 0.0
    %1972 = vmatpush1.msra.mxu0 %v45
    %1973 = vmatprep.subr.mxu0 0.0
    %1974 = vmatpush1.msra.mxu0 %v44
    %1975 = vmatprep.subr.mxu0 0.0
    %1976 = vmatpush1.msra.mxu0 %v43
    %1977 = vmatprep.subr.mxu0 0.0
    %1978 = vmatpush1.msra.mxu0 %v42
    %1979 = vmatprep.subr.mxu0 0.0
    %1980 = vmatpush1.msra.mxu0 %v41
    %1981 = vmatprep.subr.mxu0 0.0
    %1982 = vmatpush2.msra.mxu0 0.0
    %1983 = vmatprep.subr.mxu0 0.0
    %1984 = vmatpush2.msra.mxu0 0.0
    %1985 = vmatprep.subr.mxu0 0.0
    %1986 = vmatpush2.msra.mxu0 0.0
    %1987 = vmatprep.subr.mxu0 0.0
    %1988 = vmatpush2.msra.mxu0 0.0
    %1989 = vmatprep.subr.mxu0 0.0
    %1990 = vmatpush2.msra.mxu0 0.0
    %1991 = vmatprep.subr.mxu0 0.0
    %1992 = vmatpush2.msra.mxu0 0.0
    %1993 = vmatprep.subr.mxu0 0.0
    %1994 = vmatpush2.msra.mxu0 0.0
    %1995 = vmatprep.subr.mxu0 0.0
    %1996 = vmatpush2.msra.mxu0 0.0
    %1997 = vmatprep.subr.mxu0 0.0
    %1998 = vmatpush2.msra.mxu0 0.0
    %1999 = vmatprep.subr.mxu0 0.0
    %2000 = vmatpush2.msra.mxu0 0.0
    %2001 = vmatprep.subr.mxu0 0.0
    %2002 = vmatpush2.msra.mxu0 0.0
    %2003 = vmatprep.subr.mxu0 0.0
    %2004 = vmatpush2.msra.mxu0 0.0
    %2005 = vmatprep.subr.mxu0 0.0
    %2006 = vmatpush2.msra.mxu0 0.0
    %2007 = vmatprep.subr.mxu0 0.0
    %2008 = vmatpush2.msra.mxu0 0.0
    %2009 = vmatprep.subr.mxu0 0.0
    %2010 = vmatpush2.msra.mxu0 0.0
    %2011 = vmatprep.subr.mxu0 0.0
    %2012 = vmatpush2.msra.mxu0 0.0
    %2013 = vmatprep.mubr.f32.mxu0 0.0
    %2014 = vmatmul.mubr.f32.gmra.mxu0 %v1947
    %v2015 = vpop.f32.mrf.mxu0
    %v2016 = vadd.f32 0.0, %v2015
    %v2017 = vpop.f32.mrf.mxu0
    %2018 = vmatprep.mubr.f32.mxu0 0.0
    %2019 = vmatmul.mubr.f32.gmra.mxu0 %v1948
    %v2020 = vpop.f32.mrf.mxu0
    %v2021 = vadd.f32 0.0, %v2020
    %v2022 = vpop.f32.mrf.mxu0
    %2023 = vdwg.mxu0
    %v2024 = vadd.f32 %v27, %v2016
    %v2025 = vadd.f32 %v28, %v2021
    %v2026 = vsel %vm90, %v2024, 0.0
    %2027 = vadd.xlane.f32.xlu0 %v2026
    %v2028 = vpop.xlane.xlu0 %2027
    %v2029 = vsel %vm90, %v2025, 0.0
    %2030 = vadd.xlane.f32.xlu0 %v2029
    %v2031 = vpop.xlane.xlu0 %2030
    %v2032 = vrcp.pop 32.0
    %v2033 = vmul.f32 %v2028, %v2032
    %v2034 = vmul.f32 %v2031, %v2032
    %v2035 = vsub.f32 %v2024, %v2033
    %v2036 = vsub.f32 %v2025, %v2034
    %v2037 = vmul.f32 %v2035, %v2035
    %v2038 = vmul.f32 %v2036, %v2036
    %v2039 = vsel %vm90, %v2037, 0.0
    %2040 = vadd.xlane.f32.xlu0 %v2039
    %v2041 = vpop.xlane.xlu0 %2040
    %v2042 = vsel %vm90, %v2038, 0.0
    %2043 = vadd.xlane.f32.xlu0 %v2042
    %v2044 = vpop.xlane.xlu0 %2043
    %v2045 = vmul.f32 %v2041, %v2032
    %v2046 = vmul.f32 %v2044, %v2032
    %v2047 = vadd.f32 %v2045, 1e-05
    %v2048 = vadd.f32 %v2046, 1e-05
    %v2049 = vrsqrt.pop %v2047
    %v2050 = vrsqrt.pop %v2048
    %v2051 = vmul.f32 %v2035, %v2049
    %v2052 = vmul.f32 %v2036, %v2050
    %v2054 = vsel %vm90, %v2051, 0
    %v2057 = vsel %vm90, %v2052, 0
    %2059 = vmatprep.subr.mxu0 0.0
    %2060 = vmatpush1.msra.mxu0 0.0
    %2061 = vmatprep.subr.mxu0 0.0
    %2062 = vmatpush1.msra.mxu0 0.0
    %2063 = vmatprep.subr.mxu0 0.0
    %2064 = vmatpush1.msra.mxu0 0.0
    %2065 = vmatprep.subr.mxu0 0.0
    %2066 = vmatpush1.msra.mxu0 0.0
    %2067 = vmatprep.subr.mxu0 0.0
    %2068 = vmatpush1.msra.mxu0 0.0
    %2069 = vmatprep.subr.mxu0 0.0
    %2070 = vmatpush1.msra.mxu0 0.0
    %2071 = vmatprep.subr.mxu0 0.0
    %2072 = vmatpush1.msra.mxu0 0.0
    %2073 = vmatprep.subr.mxu0 0.0
    %2074 = vmatpush1.msra.mxu0 0.0
    %2075 = vmatprep.subr.mxu0 0.0
    %2076 = vmatpush1.msra.mxu0 0.0
    %2077 = vmatprep.subr.mxu0 0.0
    %2078 = vmatpush1.msra.mxu0 0.0
    %2079 = vmatprep.subr.mxu0 0.0
    %2080 = vmatpush1.msra.mxu0 0.0
    %2081 = vmatprep.subr.mxu0 0.0
    %2082 = vmatpush1.msra.mxu0 0.0
    %2083 = vmatprep.subr.mxu0 0.0
    %2084 = vmatpush1.msra.mxu0 %v60
    %2085 = vmatprep.subr.mxu0 0.0
    %2086 = vmatpush1.msra.mxu0 %v59
    %2087 = vmatprep.subr.mxu0 0.0
    %2088 = vmatpush1.msra.mxu0 %v58
    %2089 = vmatprep.subr.mxu0 0.0
    %2090 = vmatpush1.msra.mxu0 %v57
    %2091 = vmatprep.subr.mxu0 0.0
    %2092 = vmatpush2.msra.mxu0 0.0
    %2093 = vmatprep.subr.mxu0 0.0
    %2094 = vmatpush2.msra.mxu0 0.0
    %2095 = vmatprep.subr.mxu0 0.0
    %2096 = vmatpush2.msra.mxu0 0.0
    %2097 = vmatprep.subr.mxu0 0.0
    %2098 = vmatpush2.msra.mxu0 0.0
    %2099 = vmatprep.subr.mxu0 0.0
    %2100 = vmatpush2.msra.mxu0 0.0
    %2101 = vmatprep.subr.mxu0 0.0
    %2102 = vmatpush2.msra.mxu0 0.0
    %2103 = vmatprep.subr.mxu0 0.0
    %2104 = vmatpush2.msra.mxu0 0.0
    %2105 = vmatprep.subr.mxu0 0.0
    %2106 = vmatpush2.msra.mxu0 0.0
    %2107 = vmatprep.subr.mxu0 0.0
    %2108 = vmatpush2.msra.mxu0 0.0
    %2109 = vmatprep.subr.mxu0 0.0
    %2110 = vmatpush2.msra.mxu0 0.0
    %2111 = vmatprep.subr.mxu0 0.0
    %2112 = vmatpush2.msra.mxu0 0.0
    %2113 = vmatprep.subr.mxu0 0.0
    %2114 = vmatpush2.msra.mxu0 0.0
    %2115 = vmatprep.subr.mxu0 0.0
    %2116 = vmatpush2.msra.mxu0 0.0
    %2117 = vmatprep.subr.mxu0 0.0
    %2118 = vmatpush2.msra.mxu0 0.0
    %2119 = vmatprep.subr.mxu0 0.0
    %2120 = vmatpush2.msra.mxu0 0.0
    %2121 = vmatprep.subr.mxu0 0.0
    %2122 = vmatpush2.msra.mxu0 0.0
    %2123 = vmatprep.mubr.f32.mxu0 0.0
    %2124 = vmatmul.mubr.f32.gmra.mxu0 %v2054
    %v2125 = vpop.f32.mrf.mxu0
    %v2126 = vadd.f32 0.0, %v2125
    %v2127 = vpop.f32.mrf.mxu0
    %2128 = vmatprep.mubr.f32.mxu0 0.0
    %2129 = vmatmul.mubr.f32.gmra.mxu0 %v2057
    %v2130 = vpop.f32.mrf.mxu0
    %v2131 = vadd.f32 0.0, %v2130
    %v2132 = vpop.f32.mrf.mxu0
    %2133 = vdwg.mxu0
    %v2134 = vmax.f32 %v2126, 0.0
    %v2135 = vmax.f32 %v2131, 0.0
    %v2137 = vsel %vm1937, %v2134, 0
    %v2140 = vsel %vm1937, %v2135, 0
    %2142 = vmatprep.subr.mxu0 0.0
    %2143 = vmatpush1.msra.mxu0 0.0
    %2144 = vmatprep.subr.mxu0 0.0
    %2145 = vmatpush1.msra.mxu0 0.0
    %2146 = vmatprep.subr.mxu0 0.0
    %2147 = vmatpush1.msra.mxu0 0.0
    %2148 = vmatprep.subr.mxu0 0.0
    %2149 = vmatpush1.msra.mxu0 0.0
    %2150 = vmatprep.subr.mxu0 0.0
    %2151 = vmatpush1.msra.mxu0 0.0
    %2152 = vmatprep.subr.mxu0 0.0
    %2153 = vmatpush1.msra.mxu0 0.0
    %2154 = vmatprep.subr.mxu0 0.0
    %2155 = vmatpush1.msra.mxu0 0.0
    %2156 = vmatprep.subr.mxu0 0.0
    %2157 = vmatpush1.msra.mxu0 0.0
    %2158 = vmatprep.subr.mxu0 0.0
    %2159 = vmatpush1.msra.mxu0 %v68
    %2160 = vmatprep.subr.mxu0 0.0
    %2161 = vmatpush1.msra.mxu0 %v67
    %2162 = vmatprep.subr.mxu0 0.0
    %2163 = vmatpush1.msra.mxu0 %v66
    %2164 = vmatprep.subr.mxu0 0.0
    %2165 = vmatpush1.msra.mxu0 %v65
    %2166 = vmatprep.subr.mxu0 0.0
    %2167 = vmatpush1.msra.mxu0 %v64
    %2168 = vmatprep.subr.mxu0 0.0
    %2169 = vmatpush1.msra.mxu0 %v63
    %2170 = vmatprep.subr.mxu0 0.0
    %2171 = vmatpush1.msra.mxu0 %v62
    %2172 = vmatprep.subr.mxu0 0.0
    %2173 = vmatpush1.msra.mxu0 %v61
    %2174 = vmatprep.subr.mxu0 0.0
    %2175 = vmatpush2.msra.mxu0 0.0
    %2176 = vmatprep.subr.mxu0 0.0
    %2177 = vmatpush2.msra.mxu0 0.0
    %2178 = vmatprep.subr.mxu0 0.0
    %2179 = vmatpush2.msra.mxu0 0.0
    %2180 = vmatprep.subr.mxu0 0.0
    %2181 = vmatpush2.msra.mxu0 0.0
    %2182 = vmatprep.subr.mxu0 0.0
    %2183 = vmatpush2.msra.mxu0 0.0
    %2184 = vmatprep.subr.mxu0 0.0
    %2185 = vmatpush2.msra.mxu0 0.0
    %2186 = vmatprep.subr.mxu0 0.0
    %2187 = vmatpush2.msra.mxu0 0.0
    %2188 = vmatprep.subr.mxu0 0.0
    %2189 = vmatpush2.msra.mxu0 0.0
    %2190 = vmatprep.subr.mxu0 0.0
    %2191 = vmatpush2.msra.mxu0 0.0
    %2192 = vmatprep.subr.mxu0 0.0
    %2193 = vmatpush2.msra.mxu0 0.0
    %2194 = vmatprep.subr.mxu0 0.0
    %2195 = vmatpush2.msra.mxu0 0.0
    %2196 = vmatprep.subr.mxu0 0.0
    %2197 = vmatpush2.msra.mxu0 0.0
    %2198 = vmatprep.subr.mxu0 0.0
    %2199 = vmatpush2.msra.mxu0 0.0
    %2200 = vmatprep.subr.mxu0 0.0
    %2201 = vmatpush2.msra.mxu0 0.0
    %2202 = vmatprep.subr.mxu0 0.0
    %2203 = vmatpush2.msra.mxu0 0.0
    %2204 = vmatprep.subr.mxu0 0.0
    %2205 = vmatpush2.msra.mxu0 0.0
    %2206 = vmatprep.mubr.f32.mxu0 0.0
    %2207 = vmatmul.mubr.f32.gmra.mxu0 %v2137
    %v2208 = vpop.f32.mrf.mxu0
    %v2209 = vadd.f32 0.0, %v2208
    %v2210 = vpop.f32.mrf.mxu0
    %2211 = vmatprep.mubr.f32.mxu0 0.0
    %2212 = vmatmul.mubr.f32.gmra.mxu0 %v2140
    %v2213 = vpop.f32.mrf.mxu0
    %v2214 = vadd.f32 0.0, %v2213
    %v2215 = vpop.f32.mrf.mxu0
    %2216 = vdwg.mxu0
    %v2217 = vadd.f32 %v2051, %v2209
    %v2218 = vadd.f32 %v2052, %v2214
    %v2219 = vsel %vm90, %v2217, 0.0
    %2220 = vadd.xlane.f32.xlu0 %v2219
    %v2221 = vpop.xlane.xlu0 %2220
    %v2222 = vsel %vm90, %v2218, 0.0
    %2223 = vadd.xlane.f32.xlu0 %v2222
    %v2224 = vpop.xlane.xlu0 %2223
    %v2225 = vmul.f32 %v2221, %v2032
    %v2226 = vmul.f32 %v2224, %v2032
    %v2227 = vsub.f32 %v2217, %v2225
    %v2228 = vsub.f32 %v2218, %v2226
    %v2229 = vmul.f32 %v2227, %v2227
    %v2230 = vmul.f32 %v2228, %v2228
    %v2231 = vsel %vm90, %v2229, 0.0
    %2232 = vadd.xlane.f32.xlu0 %v2231
    %v2233 = vpop.xlane.xlu0 %2232
    %v2234 = vsel %vm90, %v2230, 0.0
    %2235 = vadd.xlane.f32.xlu0 %v2234
    %v2236 = vpop.xlane.xlu0 %2235
    %v2237 = vmul.f32 %v2233, %v2032
    %v2238 = vmul.f32 %v2236, %v2032
    %v2239 = vadd.f32 %v2237, 1e-05
    %v2240 = vadd.f32 %v2238, 1e-05
    %v2241 = vrsqrt.pop %v2239
    %v2242 = vrsqrt.pop %v2240
    %v2243 = vmul.f32 %v2227, %v2241
    %v2244 = vmul.f32 %v2228, %v2242
    %2245 = vst.msk [vmem:[#allocation2] sm:$0xff] %vm90, %v2243
    %2246 = vst.msk [vmem:[#allocation2 + $0x8] sm:$0xff] %vm90, %v2244
    // Predicated region
    $region30: #{encoder_forward.1} parent=1 // pred_check
      _
    $region31: #{encoder_forward.1} parent=1 // pred_check_branch
      %2248 = sbr.rel (0) target = $region33
    $region32: #{encoder_forward.1} parent=1 // pred_region
      %s2250 = ssub.s32 256, 256
      %2251 = vsyncadd [#allocation3], %s2250
      %s2252 = sshll.u32 [#allocation2], 4
      %s2253 = int_to_ptr.vmem [resolvable:$true] %s2252
      %2258 = dma.vmem_to_hbm [thread:$0]  %s2253, 256, %s7, [#allocation3], 128, 128, 8
    $region33: #{encoder_forward.1} parent=1 // pred_fallthru
      _
    // Predicated region
    $region34: #{encoder_forward.1} parent=1 // pred_check
      _
    $region35: #{encoder_forward.1} parent=1 // pred_check_branch
      %2260 = sbr.rel (0) target = $region37
    $region36: #{encoder_forward.1} parent=1 // pred_region
      %2261 = dma.done [#allocation3], 256
    $region37: #{encoder_forward.1} parent=1 // pred_fallthru
      _
    %2262 = vsyncpa [#allocation3], 1

</llo_original>
